<compile_context>
chip_gen: v5e
topology: v5e:2x2
jax: 0.10.0
libtpu: 0.0.40
codegen_flags: <defaults>
</compile_context>

<pallas_src>
import functools

import jax
import jax.numpy as jnp
from jax.experimental import pallas as pl
from jax.experimental.pallas import tpu as pltpu

LATENT_DIM = 3
NUM_CLASSES = 10
EMB_DIM = 16
HIDDEN_DIM = 128
IMG_DIM = 28 * 28  # 784


def _round_up(n, m):
    return ((n + m - 1) // m) * m


# ---------------------------------------------------------------------------
# Fused CVAE kernel (one batch tile per grid step)
# ---------------------------------------------------------------------------
def _cvae_kernel(
    x_ref,        # [TB, 784]   flattened image tile
    eps_ref,      # [TB, 3]     pre-drawn standard normal noise
    y_ref,        # [TB, 1]     int32 class labels
    t_enc_ref,    # [10, 128]   encoder per-class hidden contribution (+ b_h)
    t_dec_ref,    # [10, 128]   decoder per-class hidden contribution (+ b_h)
    w_h_img_ref,  # [784, 128]  image part of encoder fc_hidden weight
    w_mu_ref,     # [128, 3]    fc_mu weight
    b_mu_ref,     # [1, 3]      fc_mu bias
    w_lv_ref,     # [128, 3]    fc_logvar weight
    b_lv_ref,     # [1, 3]      fc_logvar bias
    w_h_z_ref,    # [3, 128]    latent part of decoder fc_hidden weight
    w_out_ref,    # [128, 784]  fc_out weight
    b_out_ref,    # [1, 784]    fc_out bias
    mu_ref,       # [TB, 3]     out: mu
    lv_ref,       # [TB, 3]     out: logvar
    out_ref,      # [TB, 784]   out: sigmoid(logits)
):
    y = y_ref[...]                 # [TB, 1] int32
    t_enc = t_enc_ref[...]         # [10, 128]
    t_dec = t_dec_ref[...]         # [10, 128]

    # Per-class hidden contributions via compare-select (VPU); biases are
    # pre-folded into the tables.  10 selects per table, unrolled.
    ce = t_enc[0:1, :]
    cd = t_dec[0:1, :]
    for c in range(1, NUM_CLASSES):
        sel = y == c               # [TB, 1]
        ce = jnp.where(sel, t_enc[c:c + 1, :], ce)
        cd = jnp.where(sel, t_dec[c:c + 1, :], cd)
    # ce / cd are now [TB, 128].

    # ---- Encoder ----
    hidden_e = jnp.maximum(
        jnp.dot(x_ref[...], w_h_img_ref[...],
                preferred_element_type=jnp.float32) + ce,
        0.0,
    )
    mu = (jnp.dot(hidden_e, w_mu_ref[...],
                  preferred_element_type=jnp.float32) + b_mu_ref[...])
    logvar = (jnp.dot(hidden_e, w_lv_ref[...],
                      preferred_element_type=jnp.float32) + b_lv_ref[...])
    mu_ref[...] = mu
    lv_ref[...] = logvar

    # ---- Reparameterize: z = mu + eps * exp(0.5 * logvar) ----
    z = mu + eps_ref[...] * jnp.exp(0.5 * logvar)

    # ---- Decoder ----
    # K=3 latent matmul as 3 VPU broadcast-FMAs (avoids a wasteful MXU push).
    w_h_z = w_h_z_ref[...]
    hd = (cd
          + z[:, 0:1] * w_h_z[0:1, :]
          + z[:, 1:2] * w_h_z[1:2, :]
          + z[:, 2:3] * w_h_z[2:3, :])
    hidden_d = jnp.maximum(hd, 0.0)
    logits = (jnp.dot(hidden_d, w_out_ref[...],
                      preferred_element_type=jnp.float32) + b_out_ref[...])
    out_ref[...] = jax.nn.sigmoid(logits)


def _cvae_pallas(x_flat, eps, y2, kp, tb):
    b_pad = x_flat.shape[0]
    grid = (b_pad // tb,)

    def batch_spec(feat):
        return pl.BlockSpec((tb, feat), lambda i: (i, 0))

    def const_spec(shape):
        return pl.BlockSpec(shape, lambda i: (0, 0))

    mu, logvar, out = pl.pallas_call(
        _cvae_kernel,
        grid=grid,
        in_specs=[
            batch_spec(IMG_DIM),                       # x
            batch_spec(LATENT_DIM),                    # eps
            batch_spec(1),                             # y
            const_spec((NUM_CLASSES, HIDDEN_DIM)),     # t_enc
            const_spec((NUM_CLASSES, HIDDEN_DIM)),     # t_dec
            const_spec((IMG_DIM, HIDDEN_DIM)),         # w_h_img
            const_spec((HIDDEN_DIM, LATENT_DIM)),      # w_mu
            const_spec((1, LATENT_DIM)),               # b_mu
            const_spec((HIDDEN_DIM, LATENT_DIM)),      # w_lv
            const_spec((1, LATENT_DIM)),               # b_lv
            const_spec((LATENT_DIM, HIDDEN_DIM)),      # w_h_z
            const_spec((HIDDEN_DIM, IMG_DIM)),         # w_out
            const_spec((1, IMG_DIM)),                  # b_out
        ],
        out_specs=(
            pl.BlockSpec((tb, LATENT_DIM), lambda i: (i, 0)),
            pl.BlockSpec((tb, LATENT_DIM), lambda i: (i, 0)),
            pl.BlockSpec((tb, IMG_DIM), lambda i: (i, 0)),
        ),
        out_shape=(
            jax.ShapeDtypeStruct((b_pad, LATENT_DIM), jnp.float32),
            jax.ShapeDtypeStruct((b_pad, LATENT_DIM), jnp.float32),
            jax.ShapeDtypeStruct((b_pad, IMG_DIM), jnp.float32),
        ),
        compiler_params=pltpu.CompilerParams(
            dimension_semantics=("parallel",),
        ),
    )(
        x_flat, eps, y2,
        kp["t_enc"], kp["t_dec"],
        kp["w_h_img"],
        kp["w_mu"], kp["b_mu"], kp["w_lv"], kp["b_lv"],
        kp["w_h_z"], kp["w_out"], kp["b_out"],
    )
    return mu, logvar, out


# ---------------------------------------------------------------------------
# Forward glue
# ---------------------------------------------------------------------------
@functools.partial(jax.jit, static_argnames=("batch_tile",))
def cvae_forward(x, y, eps, kparams, batch_tile=512):
    """x: [B, 1, 28, 28] f32 (NCHW), y: [B] int labels, eps: [B, latent] f32."""
    b = x.shape[0]
    x_flat = x.reshape(b, IMG_DIM).astype(jnp.float32)
    y2 = y.astype(jnp.int32).reshape(b, 1)
    eps = eps.astype(jnp.float32)

    # Padding-aware batch-tile choice.  Force >= 2 grid steps when there is
    # enough work so v7x can shard the grid across both TensorCores.
    n_tiles = -(-b // batch_tile)
    if b >= 16:
        n_tiles = max(n_tiles, 2)
    tb = _round_up(-(-b // n_tiles), 8)
    b_pad = n_tiles * tb

    def pad_rows(a):
        pad = b_pad - a.shape[0]
        return a if pad == 0 else jnp.pad(a, ((0, pad), (0, 0)))

    mu, logvar, out = _cvae_pallas(
        pad_rows(x_flat), pad_rows(eps), pad_rows(y2), kparams, tb)

    if b_pad != b:
        mu, logvar, out = mu[:b], logvar[:b], out[:b]
    recon = out.reshape(b, 1, 28, 28)
    return recon, mu, logvar


# ---------------------------------------------------------------------------
# Parameters (mirror nn.Linear shapes; stored transposed as [in, out]) and the
# one-time exact transform into kernel-ready form.
# ---------------------------------------------------------------------------
def init_params(key):
    def linear(key, fan_in, fan_out):
        kw, kb = jax.random.split(key)
        bound = 1.0 / jnp.sqrt(fan_in)
        w = jax.random.uniform(kw, (fan_in, fan_out), jnp.float32, -bound, bound)
        b = jax.random.uniform(kb, (1, fan_out), jnp.float32, -bound, bound)
        return w, b

    keys = jax.random.split(key, 7)

    # Encoder
    enc_w_emb, enc_b_emb = linear(keys[0], NUM_CLASSES, EMB_DIM)
    enc_w_h, enc_b_h = linear(keys[1], IMG_DIM + EMB_DIM, HIDDEN_DIM)
    enc_w_mu, enc_b_mu = linear(keys[2], HIDDEN_DIM, LATENT_DIM)
    enc_w_lv, enc_b_lv = linear(keys[3], HIDDEN_DIM, LATENT_DIM)

    # Decoder
    dec_w_emb, dec_b_emb = linear(keys[4], NUM_CLASSES, EMB_DIM)
    dec_w_h, dec_b_h = linear(keys[5], LATENT_DIM + EMB_DIM, HIDDEN_DIM)
    dec_w_out, dec_b_out = linear(keys[6], HIDDEN_DIM, IMG_DIM)

    return {
        "enc_w_emb": enc_w_emb, "enc_b_emb": enc_b_emb,
        "enc_w_h_img": enc_w_h[:IMG_DIM],     # concat-matmul split (exact)
        "enc_w_h_emb": enc_w_h[IMG_DIM:],
        "enc_b_h": enc_b_h,
        "enc_w_mu": enc_w_mu, "enc_b_mu": enc_b_mu,
        "enc_w_lv": enc_w_lv, "enc_b_lv": enc_b_lv,
        "dec_w_emb": dec_w_emb, "dec_b_emb": dec_b_emb,
        "dec_w_h_z": dec_w_h[:LATENT_DIM],
        "dec_w_h_emb": dec_w_h[LATENT_DIM:],
        "dec_b_h": dec_b_h,
        "dec_w_out": dec_w_out, "dec_b_out": dec_b_out,
    }


def prepare_kernel_params(p):
    """One-time exact transform of module params into kernel-ready form."""
    # Per-class tables: relu(W_emb[c] + b_emb) @ W_h_emb + b_h  -> [10, 128]
    # (the one-hot -> Linear -> relu -> Linear path depends only on the class).
    t_enc = (jnp.maximum(p["enc_w_emb"] + p["enc_b_emb"], 0.0)
             @ p["enc_w_h_emb"] + p["enc_b_h"])
    t_dec = (jnp.maximum(p["dec_w_emb"] + p["dec_b_emb"], 0.0)
             @ p["dec_w_h_emb"] + p["dec_b_h"])
    return {
        "t_enc": t_enc, "t_dec": t_dec,
        "w_h_img": p["enc_w_h_img"],
        "w_mu": p["enc_w_mu"], "b_mu": p["enc_b_mu"],
        "w_lv": p["enc_w_lv"], "b_lv": p["enc_b_lv"],
        "w_h_z": p["dec_w_h_z"],
        "w_out": p["dec_w_out"], "b_out": p["dec_b_out"],
    }


# ---------------------------------------------------------------------------
# Pure-JAX reference (mirrors the PyTorch module exactly) for verification.
# ---------------------------------------------------------------------------
def cvae_reference(x, y, eps, p):
    b = x.shape[0]
    xf = x.reshape(b, IMG_DIM)
    onehot = jax.nn.one_hot(y, NUM_CLASSES, dtype=jnp.float32)

    emb_e = jnp.maximum(onehot @ p["enc_w_emb"] + p["enc_b_emb"], 0.0)
    w_h_e = jnp.concatenate([p["enc_w_h_img"], p["enc_w_h_emb"]], axis=0)
    h_e = jnp.maximum(
        jnp.concatenate([xf, emb_e], axis=1) @ w_h_e + p["enc_b_h"], 0.0)
    mu = h_e @ p["enc_w_mu"] + p["enc_b_mu"]
    logvar = h_e @ p["enc_w_lv"] + p["enc_b_lv"]
    z = mu + eps * jnp.exp(0.5 * logvar)

    emb_d = jnp.maximum(onehot @ p["dec_w_emb"] + p["dec_b_emb"], 0.0)
    w_h_d = jnp.concatenate([p["dec_w_h_z"], p["dec_w_h_emb"]], axis=0)
    h_d = jnp.maximum(
        jnp.concatenate([z, emb_d], axis=1) @ w_h_d + p["dec_b_h"], 0.0)
    out = jax.nn.sigmoid(h_d @ p["dec_w_out"] + p["dec_b_out"])
    return out.reshape(b, 1, 28, 28), mu, logvar


if __name__ == "__main__":
    key = jax.random.PRNGKey(0)
    kp_key, kx, ky, keps = jax.random.split(key, 4)

    params = init_params(kp_key)
    kparams = prepare_kernel_params(params)

    B = 2
    x = jax.random.uniform(kx, (B, 1, 28, 28), jnp.float32)        # NCHW image
    y = jax.random.randint(ky, (B,), 0, NUM_CLASSES, jnp.int32)    # labels
    eps = jax.random.normal(keps, (B, LATENT_DIM), jnp.float32)    # reparam noise

    recon, mu, logvar = cvae_forward(x, y, eps, kparams)
    jax.block_until_ready((recon, mu, logvar))

    assert recon.shape == (B, 1, 28, 28)
    assert mu.shape == (B, LATENT_DIM)
    assert logvar.shape == (B, LATENT_DIM)
    assert bool(jnp.all((recon >= 0.0) & (recon <= 1.0)))
    assert bool(jnp.all(jnp.isfinite(mu))) and bool(jnp.all(jnp.isfinite(logvar)))

    # Verify against the pure-JAX reference of the PyTorch module.
    r_ref, mu_ref, lv_ref = cvae_reference(x, y, eps, params)
    assert bool(jnp.allclose(recon, r_ref, atol=1e-4, rtol=1e-4))
    assert bool(jnp.allclose(mu, mu_ref, atol=1e-4, rtol=1e-4))
    assert bool(jnp.allclose(logvar, lv_ref, atol=1e-4, rtol=1e-4))

    print("KERNEL_OK")
</pallas_src>

<mosaic_0001>
module attributes {stable_mosaic.version = 11 : i64} {
  func.func @_cvae_kernel(%arg0: i32, %arg1: memref<8x784xf32, #tpu.memory_space<vmem>>, %arg2: memref<8x3xf32, #tpu.memory_space<vmem>>, %arg3: memref<8x1xi32, #tpu.memory_space<vmem>>, %arg4: memref<10x128xf32, #tpu.memory_space<vmem>>, %arg5: memref<10x128xf32, #tpu.memory_space<vmem>>, %arg6: memref<784x128xf32, #tpu.memory_space<vmem>>, %arg7: memref<128x3xf32, #tpu.memory_space<vmem>>, %arg8: memref<1x3xf32, #tpu.memory_space<vmem>>, %arg9: memref<128x3xf32, #tpu.memory_space<vmem>>, %arg10: memref<1x3xf32, #tpu.memory_space<vmem>>, %arg11: memref<3x128xf32, #tpu.memory_space<vmem>>, %arg12: memref<128x784xf32, #tpu.memory_space<vmem>>, %arg13: memref<1x784xf32, #tpu.memory_space<vmem>>, %arg14: memref<8x3xf32, #tpu.memory_space<vmem>>, %arg15: memref<8x3xf32, #tpu.memory_space<vmem>>, %arg16: memref<8x784xf32, #tpu.memory_space<vmem>>) attributes {dimension_semantics = [#tpu.dimension_semantics<parallel>], iteration_bounds = array<i64: 1>, scalar_prefetch = 0 : i64, scratch_operands = 0 : i64, tpu.core_type = #tpu.core_type<tc>, window_params = [{transform_indices = @transform_0, window_bounds = array<i64: 8, 784>}, {transform_indices = @transform_1, window_bounds = array<i64: 8, 3>}, {transform_indices = @transform_2, window_bounds = array<i64: 8, 1>}, {pipeline_mode = #tpu.pipeline_mode<synchronous>, transform_indices = @transform_3, window_bounds = array<i64: 10, 128>}, {pipeline_mode = #tpu.pipeline_mode<synchronous>, transform_indices = @transform_4, window_bounds = array<i64: 10, 128>}, {pipeline_mode = #tpu.pipeline_mode<synchronous>, transform_indices = @transform_5, window_bounds = array<i64: 784, 128>}, {pipeline_mode = #tpu.pipeline_mode<synchronous>, transform_indices = @transform_6, window_bounds = array<i64: 128, 3>}, {pipeline_mode = #tpu.pipeline_mode<synchronous>, transform_indices = @transform_7, window_bounds = array<i64: 1, 3>}, {pipeline_mode = #tpu.pipeline_mode<synchronous>, transform_indices = @transform_8, window_bounds = array<i64: 128, 3>}, {pipeline_mode = #tpu.pipeline_mode<synchronous>, transform_indices = @transform_9, window_bounds = array<i64: 1, 3>}, {pipeline_mode = #tpu.pipeline_mode<synchronous>, transform_indices = @transform_10, window_bounds = array<i64: 3, 128>}, {pipeline_mode = #tpu.pipeline_mode<synchronous>, transform_indices = @transform_11, window_bounds = array<i64: 128, 784>}, {pipeline_mode = #tpu.pipeline_mode<synchronous>, transform_indices = @transform_12, window_bounds = array<i64: 1, 784>}, {transform_indices = @transform_13, window_bounds = array<i64: 8, 3>}, {transform_indices = @transform_14, window_bounds = array<i64: 8, 3>}, {transform_indices = @transform_15, window_bounds = array<i64: 8, 784>}]} {
    %c0 = arith.constant 0 : index
    %c0_0 = arith.constant 0 : index
    %0 = vector.load %arg3[%c0, %c0_0] : memref<8x1xi32, #tpu.memory_space<vmem>>, vector<8x1xi32>
    %c0_1 = arith.constant 0 : index
    %c0_2 = arith.constant 0 : index
    %1 = vector.load %arg4[%c0_1, %c0_2] : memref<10x128xf32, #tpu.memory_space<vmem>>, vector<10x128xf32>
    %c0_3 = arith.constant 0 : index
    %c0_4 = arith.constant 0 : index
    %2 = vector.load %arg5[%c0_3, %c0_4] : memref<10x128xf32, #tpu.memory_space<vmem>>, vector<10x128xf32>
    %3 = vector.extract_strided_slice %1 {offsets = [0, 0], sizes = [1, 128], strides = [1, 1]} : vector<10x128xf32> to vector<1x128xf32>
    %4 = vector.extract_strided_slice %2 {offsets = [0, 0], sizes = [1, 128], strides = [1, 1]} : vector<10x128xf32> to vector<1x128xf32>
    %c1_i32 = arith.constant 1 : i32
    %5 = vector.broadcast %c1_i32 : i32 to vector<8x1xi32>
    %6 = arith.cmpi eq, %0, %5 : vector<8x1xi32>
    %7 = vector.extract_strided_slice %1 {offsets = [1, 0], sizes = [1, 128], strides = [1, 1]} : vector<10x128xf32> to vector<1x128xf32>
    %8 = vector.shape_cast %6 : vector<8x1xi1> to vector<8x1xi1>
    %9 = vector.broadcast %8 : vector<8x1xi1> to vector<8x128xi1>
    %10 = vector.shape_cast %7 : vector<1x128xf32> to vector<1x128xf32>
    %11 = vector.broadcast %10 : vector<1x128xf32> to vector<8x128xf32>
    %12 = vector.shape_cast %3 : vector<1x128xf32> to vector<1x128xf32>
    %13 = vector.broadcast %12 : vector<1x128xf32> to vector<8x128xf32>
    %14 = arith.select %9, %11, %13 : vector<8x128xi1>, vector<8x128xf32>
    %15 = vector.extract_strided_slice %2 {offsets = [1, 0], sizes = [1, 128], strides = [1, 1]} : vector<10x128xf32> to vector<1x128xf32>
    %16 = vector.shape_cast %6 : vector<8x1xi1> to vector<8x1xi1>
    %17 = vector.broadcast %16 : vector<8x1xi1> to vector<8x128xi1>
    %18 = vector.shape_cast %15 : vector<1x128xf32> to vector<1x128xf32>
    %19 = vector.broadcast %18 : vector<1x128xf32> to vector<8x128xf32>
    %20 = vector.shape_cast %4 : vector<1x128xf32> to vector<1x128xf32>
    %21 = vector.broadcast %20 : vector<1x128xf32> to vector<8x128xf32>
    %22 = arith.select %17, %19, %21 : vector<8x128xi1>, vector<8x128xf32>
    %c2_i32 = arith.constant 2 : i32
    %23 = vector.broadcast %c2_i32 : i32 to vector<8x1xi32>
    %24 = arith.cmpi eq, %0, %23 : vector<8x1xi32>
    %25 = vector.extract_strided_slice %1 {offsets = [2, 0], sizes = [1, 128], strides = [1, 1]} : vector<10x128xf32> to vector<1x128xf32>
    %26 = vector.shape_cast %24 : vector<8x1xi1> to vector<8x1xi1>
    %27 = vector.broadcast %26 : vector<8x1xi1> to vector<8x128xi1>
    %28 = vector.shape_cast %25 : vector<1x128xf32> to vector<1x128xf32>
    %29 = vector.broadcast %28 : vector<1x128xf32> to vector<8x128xf32>
    %30 = arith.select %27, %29, %14 : vector<8x128xi1>, vector<8x128xf32>
    %31 = vector.extract_strided_slice %2 {offsets = [2, 0], sizes = [1, 128], strides = [1, 1]} : vector<10x128xf32> to vector<1x128xf32>
    %32 = vector.shape_cast %24 : vector<8x1xi1> to vector<8x1xi1>
    %33 = vector.broadcast %32 : vector<8x1xi1> to vector<8x128xi1>
    %34 = vector.shape_cast %31 : vector<1x128xf32> to vector<1x128xf32>
    %35 = vector.broadcast %34 : vector<1x128xf32> to vector<8x128xf32>
    %36 = arith.select %33, %35, %22 : vector<8x128xi1>, vector<8x128xf32>
    %c3_i32 = arith.constant 3 : i32
    %37 = vector.broadcast %c3_i32 : i32 to vector<8x1xi32>
    %38 = arith.cmpi eq, %0, %37 : vector<8x1xi32>
    %39 = vector.extract_strided_slice %1 {offsets = [3, 0], sizes = [1, 128], strides = [1, 1]} : vector<10x128xf32> to vector<1x128xf32>
    %40 = vector.shape_cast %38 : vector<8x1xi1> to vector<8x1xi1>
    %41 = vector.broadcast %40 : vector<8x1xi1> to vector<8x128xi1>
    %42 = vector.shape_cast %39 : vector<1x128xf32> to vector<1x128xf32>
    %43 = vector.broadcast %42 : vector<1x128xf32> to vector<8x128xf32>
    %44 = arith.select %41, %43, %30 : vector<8x128xi1>, vector<8x128xf32>
    %45 = vector.extract_strided_slice %2 {offsets = [3, 0], sizes = [1, 128], strides = [1, 1]} : vector<10x128xf32> to vector<1x128xf32>
    %46 = vector.shape_cast %38 : vector<8x1xi1> to vector<8x1xi1>
    %47 = vector.broadcast %46 : vector<8x1xi1> to vector<8x128xi1>
    %48 = vector.shape_cast %45 : vector<1x128xf32> to vector<1x128xf32>
    %49 = vector.broadcast %48 : vector<1x128xf32> to vector<8x128xf32>
    %50 = arith.select %47, %49, %36 : vector<8x128xi1>, vector<8x128xf32>
    %c4_i32 = arith.constant 4 : i32
    %51 = vector.broadcast %c4_i32 : i32 to vector<8x1xi32>
    %52 = arith.cmpi eq, %0, %51 : vector<8x1xi32>
    %53 = vector.extract_strided_slice %1 {offsets = [4, 0], sizes = [1, 128], strides = [1, 1]} : vector<10x128xf32> to vector<1x128xf32>
    %54 = vector.shape_cast %52 : vector<8x1xi1> to vector<8x1xi1>
    %55 = vector.broadcast %54 : vector<8x1xi1> to vector<8x128xi1>
    %56 = vector.shape_cast %53 : vector<1x128xf32> to vector<1x128xf32>
    %57 = vector.broadcast %56 : vector<1x128xf32> to vector<8x128xf32>
    %58 = arith.select %55, %57, %44 : vector<8x128xi1>, vector<8x128xf32>
    %59 = vector.extract_strided_slice %2 {offsets = [4, 0], sizes = [1, 128], strides = [1, 1]} : vector<10x128xf32> to vector<1x128xf32>
    %60 = vector.shape_cast %52 : vector<8x1xi1> to vector<8x1xi1>
    %61 = vector.broadcast %60 : vector<8x1xi1> to vector<8x128xi1>
    %62 = vector.shape_cast %59 : vector<1x128xf32> to vector<1x128xf32>
    %63 = vector.broadcast %62 : vector<1x128xf32> to vector<8x128xf32>
    %64 = arith.select %61, %63, %50 : vector<8x128xi1>, vector<8x128xf32>
    %c5_i32 = arith.constant 5 : i32
    %65 = vector.broadcast %c5_i32 : i32 to vector<8x1xi32>
    %66 = arith.cmpi eq, %0, %65 : vector<8x1xi32>
    %67 = vector.extract_strided_slice %1 {offsets = [5, 0], sizes = [1, 128], strides = [1, 1]} : vector<10x128xf32> to vector<1x128xf32>
    %68 = vector.shape_cast %66 : vector<8x1xi1> to vector<8x1xi1>
    %69 = vector.broadcast %68 : vector<8x1xi1> to vector<8x128xi1>
    %70 = vector.shape_cast %67 : vector<1x128xf32> to vector<1x128xf32>
    %71 = vector.broadcast %70 : vector<1x128xf32> to vector<8x128xf32>
    %72 = arith.select %69, %71, %58 : vector<8x128xi1>, vector<8x128xf32>
    %73 = vector.extract_strided_slice %2 {offsets = [5, 0], sizes = [1, 128], strides = [1, 1]} : vector<10x128xf32> to vector<1x128xf32>
    %74 = vector.shape_cast %66 : vector<8x1xi1> to vector<8x1xi1>
    %75 = vector.broadcast %74 : vector<8x1xi1> to vector<8x128xi1>
    %76 = vector.shape_cast %73 : vector<1x128xf32> to vector<1x128xf32>
    %77 = vector.broadcast %76 : vector<1x128xf32> to vector<8x128xf32>
    %78 = arith.select %75, %77, %64 : vector<8x128xi1>, vector<8x128xf32>
    %c6_i32 = arith.constant 6 : i32
    %79 = vector.broadcast %c6_i32 : i32 to vector<8x1xi32>
    %80 = arith.cmpi eq, %0, %79 : vector<8x1xi32>
    %81 = vector.extract_strided_slice %1 {offsets = [6, 0], sizes = [1, 128], strides = [1, 1]} : vector<10x128xf32> to vector<1x128xf32>
    %82 = vector.shape_cast %80 : vector<8x1xi1> to vector<8x1xi1>
    %83 = vector.broadcast %82 : vector<8x1xi1> to vector<8x128xi1>
    %84 = vector.shape_cast %81 : vector<1x128xf32> to vector<1x128xf32>
    %85 = vector.broadcast %84 : vector<1x128xf32> to vector<8x128xf32>
    %86 = arith.select %83, %85, %72 : vector<8x128xi1>, vector<8x128xf32>
    %87 = vector.extract_strided_slice %2 {offsets = [6, 0], sizes = [1, 128], strides = [1, 1]} : vector<10x128xf32> to vector<1x128xf32>
    %88 = vector.shape_cast %80 : vector<8x1xi1> to vector<8x1xi1>
    %89 = vector.broadcast %88 : vector<8x1xi1> to vector<8x128xi1>
    %90 = vector.shape_cast %87 : vector<1x128xf32> to vector<1x128xf32>
    %91 = vector.broadcast %90 : vector<1x128xf32> to vector<8x128xf32>
    %92 = arith.select %89, %91, %78 : vector<8x128xi1>, vector<8x128xf32>
    %c7_i32 = arith.constant 7 : i32
    %93 = vector.broadcast %c7_i32 : i32 to vector<8x1xi32>
    %94 = arith.cmpi eq, %0, %93 : vector<8x1xi32>
    %95 = vector.extract_strided_slice %1 {offsets = [7, 0], sizes = [1, 128], strides = [1, 1]} : vector<10x128xf32> to vector<1x128xf32>
    %96 = vector.shape_cast %94 : vector<8x1xi1> to vector<8x1xi1>
    %97 = vector.broadcast %96 : vector<8x1xi1> to vector<8x128xi1>
    %98 = vector.shape_cast %95 : vector<1x128xf32> to vector<1x128xf32>
    %99 = vector.broadcast %98 : vector<1x128xf32> to vector<8x128xf32>
    %100 = arith.select %97, %99, %86 : vector<8x128xi1>, vector<8x128xf32>
    %101 = vector.extract_strided_slice %2 {offsets = [7, 0], sizes = [1, 128], strides = [1, 1]} : vector<10x128xf32> to vector<1x128xf32>
    %102 = vector.shape_cast %94 : vector<8x1xi1> to vector<8x1xi1>
    %103 = vector.broadcast %102 : vector<8x1xi1> to vector<8x128xi1>
    %104 = vector.shape_cast %101 : vector<1x128xf32> to vector<1x128xf32>
    %105 = vector.broadcast %104 : vector<1x128xf32> to vector<8x128xf32>
    %106 = arith.select %103, %105, %92 : vector<8x128xi1>, vector<8x128xf32>
    %c8_i32 = arith.constant 8 : i32
    %107 = vector.broadcast %c8_i32 : i32 to vector<8x1xi32>
    %108 = arith.cmpi eq, %0, %107 : vector<8x1xi32>
    %109 = vector.extract_strided_slice %1 {offsets = [8, 0], sizes = [1, 128], strides = [1, 1]} : vector<10x128xf32> to vector<1x128xf32>
    %110 = vector.shape_cast %108 : vector<8x1xi1> to vector<8x1xi1>
    %111 = vector.broadcast %110 : vector<8x1xi1> to vector<8x128xi1>
    %112 = vector.shape_cast %109 : vector<1x128xf32> to vector<1x128xf32>
    %113 = vector.broadcast %112 : vector<1x128xf32> to vector<8x128xf32>
    %114 = arith.select %111, %113, %100 : vector<8x128xi1>, vector<8x128xf32>
    %115 = vector.extract_strided_slice %2 {offsets = [8, 0], sizes = [1, 128], strides = [1, 1]} : vector<10x128xf32> to vector<1x128xf32>
    %116 = vector.shape_cast %108 : vector<8x1xi1> to vector<8x1xi1>
    %117 = vector.broadcast %116 : vector<8x1xi1> to vector<8x128xi1>
    %118 = vector.shape_cast %115 : vector<1x128xf32> to vector<1x128xf32>
    %119 = vector.broadcast %118 : vector<1x128xf32> to vector<8x128xf32>
    %120 = arith.select %117, %119, %106 : vector<8x128xi1>, vector<8x128xf32>
    %c9_i32 = arith.constant 9 : i32
    %121 = vector.broadcast %c9_i32 : i32 to vector<8x1xi32>
    %122 = arith.cmpi eq, %0, %121 : vector<8x1xi32>
    %123 = vector.extract_strided_slice %1 {offsets = [9, 0], sizes = [1, 128], strides = [1, 1]} : vector<10x128xf32> to vector<1x128xf32>
    %124 = vector.shape_cast %122 : vector<8x1xi1> to vector<8x1xi1>
    %125 = vector.broadcast %124 : vector<8x1xi1> to vector<8x128xi1>
    %126 = vector.shape_cast %123 : vector<1x128xf32> to vector<1x128xf32>
    %127 = vector.broadcast %126 : vector<1x128xf32> to vector<8x128xf32>
    %128 = arith.select %125, %127, %114 : vector<8x128xi1>, vector<8x128xf32>
    %129 = vector.extract_strided_slice %2 {offsets = [9, 0], sizes = [1, 128], strides = [1, 1]} : vector<10x128xf32> to vector<1x128xf32>
    %130 = vector.shape_cast %122 : vector<8x1xi1> to vector<8x1xi1>
    %131 = vector.broadcast %130 : vector<8x1xi1> to vector<8x128xi1>
    %132 = vector.shape_cast %129 : vector<1x128xf32> to vector<1x128xf32>
    %133 = vector.broadcast %132 : vector<1x128xf32> to vector<8x128xf32>
    %134 = arith.select %131, %133, %120 : vector<8x128xi1>, vector<8x128xf32>
    %c0_5 = arith.constant 0 : index
    %c0_6 = arith.constant 0 : index
    %135 = vector.load %arg1[%c0_5, %c0_6] : memref<8x784xf32, #tpu.memory_space<vmem>>, vector<8x784xf32>
    %c0_7 = arith.constant 0 : index
    %c0_8 = arith.constant 0 : index
    %136 = vector.load %arg6[%c0_7, %c0_8] : memref<784x128xf32, #tpu.memory_space<vmem>>, vector<784x128xf32>
    %cst = arith.constant dense<0.000000e+00> : vector<8x128xf32>
    %137 = tpu.matmul %135, %136, %cst {dimension_numbers = #tpu.dot_dimension_numbers<[1], [0], [0], [1], [0, 0, 1, 1], [], []>} : vector<8x784xf32>, vector<784x128xf32>, vector<8x128xf32> -> vector<8x128xf32>
    %138 = arith.addf %137, %128 : vector<8x128xf32>
    %cst_9 = arith.constant 0.000000e+00 : f32
    %139 = vector.broadcast %cst_9 : f32 to vector<8x128xf32>
    %140 = arith.maximumf %138, %139 : vector<8x128xf32>
    %c0_10 = arith.constant 0 : index
    %c0_11 = arith.constant 0 : index
    %141 = vector.load %arg7[%c0_10, %c0_11] : memref<128x3xf32, #tpu.memory_space<vmem>>, vector<128x3xf32>
    %cst_12 = arith.constant dense<0.000000e+00> : vector<8x3xf32>
    %142 = tpu.matmul %140, %141, %cst_12 {dimension_numbers = #tpu.dot_dimension_numbers<[1], [0], [0], [1], [0, 0, 1, 1], [], []>} : vector<8x128xf32>, vector<128x3xf32>, vector<8x3xf32> -> vector<8x3xf32>
    %c0_13 = arith.constant 0 : index
    %c0_14 = arith.constant 0 : index
    %143 = vector.load %arg8[%c0_13, %c0_14] : memref<1x3xf32, #tpu.memory_space<vmem>>, vector<1x3xf32>
    %144 = vector.broadcast %143 : vector<1x3xf32> to vector<8x3xf32>
    %145 = arith.addf %142, %144 : vector<8x3xf32>
    %c0_15 = arith.constant 0 : index
    %c0_16 = arith.constant 0 : index
    %146 = vector.load %arg9[%c0_15, %c0_16] : memref<128x3xf32, #tpu.memory_space<vmem>>, vector<128x3xf32>
    %cst_17 = arith.constant dense<0.000000e+00> : vector<8x3xf32>
    %147 = tpu.matmul %140, %146, %cst_17 {dimension_numbers = #tpu.dot_dimension_numbers<[1], [0], [0], [1], [0, 0, 1, 1], [], []>} : vector<8x128xf32>, vector<128x3xf32>, vector<8x3xf32> -> vector<8x3xf32>
    %c0_18 = arith.constant 0 : index
    %c0_19 = arith.constant 0 : index
    %148 = vector.load %arg10[%c0_18, %c0_19] : memref<1x3xf32, #tpu.memory_space<vmem>>, vector<1x3xf32>
    %149 = vector.broadcast %148 : vector<1x3xf32> to vector<8x3xf32>
    %150 = arith.addf %147, %149 : vector<8x3xf32>
    %c0_20 = arith.constant 0 : index
    %c0_21 = arith.constant 0 : index
    %151 = vector.load %arg14[%c0_20, %c0_21] : memref<8x3xf32, #tpu.memory_space<vmem>>, vector<8x3xf32>
    tpu.vector_store %arg14[%c0_20, %c0_21], %145 {strides = array<i32>} : memref<8x3xf32, #tpu.memory_space<vmem>>, vector<8x3xf32>,
    %c0_22 = arith.constant 0 : index
    %c0_23 = arith.constant 0 : index
    %152 = vector.load %arg15[%c0_22, %c0_23] : memref<8x3xf32, #tpu.memory_space<vmem>>, vector<8x3xf32>
    tpu.vector_store %arg15[%c0_22, %c0_23], %150 {strides = array<i32>} : memref<8x3xf32, #tpu.memory_space<vmem>>, vector<8x3xf32>,
    %c0_24 = arith.constant 0 : index
    %c0_25 = arith.constant 0 : index
    %153 = vector.load %arg2[%c0_24, %c0_25] : memref<8x3xf32, #tpu.memory_space<vmem>>, vector<8x3xf32>
    %cst_26 = arith.constant 5.000000e-01 : f32
    %154 = vector.broadcast %cst_26 : f32 to vector<8x3xf32>
    %155 = arith.mulf %154, %150 : vector<8x3xf32>
    %156 = math.exp %155 : vector<8x3xf32>
    %157 = arith.mulf %153, %156 : vector<8x3xf32>
    %158 = arith.addf %145, %157 : vector<8x3xf32>
    %c0_27 = arith.constant 0 : index
    %c0_28 = arith.constant 0 : index
    %159 = vector.load %arg11[%c0_27, %c0_28] : memref<3x128xf32, #tpu.memory_space<vmem>>, vector<3x128xf32>
    %160 = vector.extract_strided_slice %158 {offsets = [0, 0], sizes = [8, 1], strides = [1, 1]} : vector<8x3xf32> to vector<8x1xf32>
    %161 = vector.extract_strided_slice %159 {offsets = [0, 0], sizes = [1, 128], strides = [1, 1]} : vector<3x128xf32> to vector<1x128xf32>
    %162 = vector.broadcast %160 : vector<8x1xf32> to vector<8x128xf32>
    %163 = vector.broadcast %161 : vector<1x128xf32> to vector<8x128xf32>
    %164 = arith.mulf %162, %163 : vector<8x128xf32>
    %165 = arith.addf %134, %164 : vector<8x128xf32>
    %166 = vector.extract_strided_slice %158 {offsets = [0, 1], sizes = [8, 1], strides = [1, 1]} : vector<8x3xf32> to vector<8x1xf32>
    %167 = vector.extract_strided_slice %159 {offsets = [1, 0], sizes = [1, 128], strides = [1, 1]} : vector<3x128xf32> to vector<1x128xf32>
    %168 = vector.broadcast %166 : vector<8x1xf32> to vector<8x128xf32>
    %169 = vector.broadcast %167 : vector<1x128xf32> to vector<8x128xf32>
    %170 = arith.mulf %168, %169 : vector<8x128xf32>
    %171 = arith.addf %165, %170 : vector<8x128xf32>
    %172 = vector.extract_strided_slice %158 {offsets = [0, 2], sizes = [8, 1], strides = [1, 1]} : vector<8x3xf32> to vector<8x1xf32>
    %173 = vector.extract_strided_slice %159 {offsets = [2, 0], sizes = [1, 128], strides = [1, 1]} : vector<3x128xf32> to vector<1x128xf32>
    %174 = vector.broadcast %172 : vector<8x1xf32> to vector<8x128xf32>
    %175 = vector.broadcast %173 : vector<1x128xf32> to vector<8x128xf32>
    %176 = arith.mulf %174, %175 : vector<8x128xf32>
    %177 = arith.addf %171, %176 : vector<8x128xf32>
    %cst_29 = arith.constant 0.000000e+00 : f32
    %178 = vector.broadcast %cst_29 : f32 to vector<8x128xf32>
    %179 = arith.maximumf %177, %178 : vector<8x128xf32>
    %c0_30 = arith.constant 0 : index
    %c0_31 = arith.constant 0 : index
    %180 = vector.load %arg12[%c0_30, %c0_31] : memref<128x784xf32, #tpu.memory_space<vmem>>, vector<128x784xf32>
    %cst_32 = arith.constant dense<0.000000e+00> : vector<8x784xf32>
    %181 = tpu.matmul %179, %180, %cst_32 {dimension_numbers = #tpu.dot_dimension_numbers<[1], [0], [0], [1], [0, 0, 1, 1], [], []>} : vector<8x128xf32>, vector<128x784xf32>, vector<8x784xf32> -> vector<8x784xf32>
    %c0_33 = arith.constant 0 : index
    %c0_34 = arith.constant 0 : index
    %182 = vector.load %arg13[%c0_33, %c0_34] : memref<1x784xf32, #tpu.memory_space<vmem>>, vector<1x784xf32>
    %183 = vector.broadcast %182 : vector<1x784xf32> to vector<8x784xf32>
    %184 = arith.addf %181, %183 : vector<8x784xf32>
    %185 = arith.negf %184 : vector<8x784xf32>
    %186 = math.exp %185 : vector<8x784xf32>
    %cst_35 = arith.constant 1.000000e+00 : f32
    %187 = vector.broadcast %cst_35 : f32 to vector<8x784xf32>
    %188 = arith.addf %187, %186 : vector<8x784xf32>
    %189 = arith.divf %187, %188 : vector<8x784xf32>
    %c0_36 = arith.constant 0 : index
    %c0_37 = arith.constant 0 : index
    %190 = vector.load %arg16[%c0_36, %c0_37] : memref<8x784xf32, #tpu.memory_space<vmem>>, vector<8x784xf32>
    tpu.vector_store %arg16[%c0_36, %c0_37], %189 {strides = array<i32>} : memref<8x784xf32, #tpu.memory_space<vmem>>, vector<8x784xf32>,
    return
  }
  func.func @transform_0(%arg0: i32) -> (i32, i32) {
    %c0_i32 = arith.constant 0 : i32
    %c0_i32_0 = arith.constant 0 : i32
    return %arg0, %c0_i32 : i32, i32
  }
  func.func @transform_1(%arg0: i32) -> (i32, i32) {
    %c0_i32 = arith.constant 0 : i32
    %c0_i32_0 = arith.constant 0 : i32
    return %arg0, %c0_i32 : i32, i32
  }
  func.func @transform_2(%arg0: i32) -> (i32, i32) {
    %c0_i32 = arith.constant 0 : i32
    %c0_i32_0 = arith.constant 0 : i32
    return %arg0, %c0_i32 : i32, i32
  }
  func.func @transform_3(%arg0: i32) -> (i32, i32) {
    %c0_i32 = arith.constant 0 : i32
    %c0_i32_0 = arith.constant 0 : i32
    %c0_i32_1 = arith.constant 0 : i32
    return %c0_i32, %c0_i32_0 : i32, i32
  }
  func.func @transform_4(%arg0: i32) -> (i32, i32) {
    %c0_i32 = arith.constant 0 : i32
    %c0_i32_0 = arith.constant 0 : i32
    %c0_i32_1 = arith.constant 0 : i32
    return %c0_i32, %c0_i32_0 : i32, i32
  }
  func.func @transform_5(%arg0: i32) -> (i32, i32) {
    %c0_i32 = arith.constant 0 : i32
    %c0_i32_0 = arith.constant 0 : i32
    %c0_i32_1 = arith.constant 0 : i32
    return %c0_i32, %c0_i32_0 : i32, i32
  }
  func.func @transform_6(%arg0: i32) -> (i32, i32) {
    %c0_i32 = arith.constant 0 : i32
    %c0_i32_0 = arith.constant 0 : i32
    %c0_i32_1 = arith.constant 0 : i32
    return %c0_i32, %c0_i32_0 : i32, i32
  }
  func.func @transform_7(%arg0: i32) -> (i32, i32) {
    %c0_i32 = arith.constant 0 : i32
    %c0_i32_0 = arith.constant 0 : i32
    %c0_i32_1 = arith.constant 0 : i32
    return %c0_i32, %c0_i32_0 : i32, i32
  }
  func.func @transform_8(%arg0: i32) -> (i32, i32) {
    %c0_i32 = arith.constant 0 : i32
    %c0_i32_0 = arith.constant 0 : i32
    %c0_i32_1 = arith.constant 0 : i32
    return %c0_i32, %c0_i32_0 : i32, i32
  }
  func.func @transform_9(%arg0: i32) -> (i32, i32) {
    %c0_i32 = arith.constant 0 : i32
    %c0_i32_0 = arith.constant 0 : i32
    %c0_i32_1 = arith.constant 0 : i32
    return %c0_i32, %c0_i32_0 : i32, i32
  }
  func.func @transform_10(%arg0: i32) -> (i32, i32) {
    %c0_i32 = arith.constant 0 : i32
    %c0_i32_0 = arith.constant 0 : i32
    %c0_i32_1 = arith.constant 0 : i32
    return %c0_i32, %c0_i32_0 : i32, i32
  }
  func.func @transform_11(%arg0: i32) -> (i32, i32) {
    %c0_i32 = arith.constant 0 : i32
    %c0_i32_0 = arith.constant 0 : i32
    %c0_i32_1 = arith.constant 0 : i32
    return %c0_i32, %c0_i32_0 : i32, i32
  }
  func.func @transform_12(%arg0: i32) -> (i32, i32) {
    %c0_i32 = arith.constant 0 : i32
    %c0_i32_0 = arith.constant 0 : i32
    %c0_i32_1 = arith.constant 0 : i32
    return %c0_i32, %c0_i32_0 : i32, i32
  }
  func.func @transform_13(%arg0: i32) -> (i32, i32) {
    %c0_i32 = arith.constant 0 : i32
    %c0_i32_0 = arith.constant 0 : i32
    return %arg0, %c0_i32 : i32, i32
  }
  func.func @transform_14(%arg0: i32) -> (i32, i32) {
    %c0_i32 = arith.constant 0 : i32
    %c0_i32_0 = arith.constant 0 : i32
    return %arg0, %c0_i32 : i32, i32
  }
  func.func @transform_15(%arg0: i32) -> (i32, i32) {
    %c0_i32 = arith.constant 0 : i32
    %c0_i32_0 = arith.constant 0 : i32
    return %arg0, %c0_i32 : i32, i32
  }
}

</mosaic_0001>

<llo_original>
// kernel: cvae_forward.1
$region0: #{cvae_forward.1}
  #allocation0 [shape = 'u32[]', space=smem, size = 0x4, offset = 0x4, fixed_abs, tag = 'smem constant byte address 0x4 - core index']
  #allocation1 [shape = 'u32[72,128]{1,0:T(1,128)}', space=vmem, size = 0x9000, scoped, tag = 'internal scratch']
  %s0 = inlined_call_operand.vmem [shape: f32[8,784], index: 0, kind: input, shape index: {}]
  %s1 = inlined_call_operand.vmem [shape: f32[8,3], index: 1, kind: input, shape index: {}]
  %s2 = inlined_call_operand.vmem [shape: s32[8,1], index: 2, kind: input, shape index: {}]
  %s3 = inlined_call_operand.vmem [shape: f32[10,128], index: 3, kind: input, shape index: {}]
  %s4 = inlined_call_operand.vmem [shape: f32[10,128], index: 4, kind: input, shape index: {}]
  %s5 = inlined_call_operand.vmem [shape: f32[784,128], index: 5, kind: input, shape index: {}]
  %s6 = inlined_call_operand.vmem [shape: f32[128,3], index: 6, kind: input, shape index: {}]
  %s7 = inlined_call_operand.vmem [shape: f32[1,3], index: 7, kind: input, shape index: {}]
  %s8 = inlined_call_operand.vmem [shape: f32[128,3], index: 8, kind: input, shape index: {}]
  %s9 = inlined_call_operand.vmem [shape: f32[1,3], index: 9, kind: input, shape index: {}]
  %s10 = inlined_call_operand.vmem [shape: f32[3,128], index: 10, kind: input, shape index: {}]
  %s11 = inlined_call_operand.vmem [shape: f32[128,784], index: 11, kind: input, shape index: {}]
  %s12 = inlined_call_operand.vmem [shape: f32[1,784], index: 12, kind: input, shape index: {}]
  %s13 = inlined_call_operand.vmem [shape: f32[8,3], index: 13, kind: output, shape index: {0}]
  %s14 = inlined_call_operand.vmem [shape: f32[8,3], index: 14, kind: output, shape index: {1}]
  %s15 = inlined_call_operand.vmem [shape: f32[8,784], index: 15, kind: output, shape index: {2}]
  %16 = xla_tuple %s13, %s14, %s15
  %s17 = sld [smem:[#allocation0]]
  $region78: #{cvae_forward.1} parent=0
    _
  %s19 = ssub.s32 1, %s17
  %s20 = scalar_select 0, %s19, %s17
  // Predicated region
  $region2: #{cvae_forward.1} parent=0 // pred_check
    _
  $region3: #{cvae_forward.1} parent=0 // pred_check_branch
    %22 = sbr.rel (0) target = $region5
  $region4: #{cvae_forward.1} parent=0 // pred_region
    _
  $region5: #{cvae_forward.1} parent=0 // pred_fallthru
    _
  // Predicated region
  $region6: #{cvae_forward.1} parent=0 // pred_check
    _
  $region7: #{cvae_forward.1} parent=0 // pred_check_branch
    %24 = sbr.rel (0) target = $region9
  $region8: #{cvae_forward.1} parent=0 // pred_region
    _
  $region9: #{cvae_forward.1} parent=0 // pred_fallthru
    _
  // Predicated region
  $region10: #{cvae_forward.1} parent=0 // pred_check
    _
  $region11: #{cvae_forward.1} parent=0 // pred_check_branch
    %26 = sbr.rel (0) target = $region13
  $region12: #{cvae_forward.1} parent=0 // pred_region
    _
  $region13: #{cvae_forward.1} parent=0 // pred_fallthru
    _
  // Predicated region
  $region14: #{cvae_forward.1} parent=0 // pred_check
    _
  $region15: #{cvae_forward.1} parent=0 // pred_check_branch
    %28 = sbr.rel (0) target = $region17
  $region16: #{cvae_forward.1} parent=0 // pred_region
    _
  $region17: #{cvae_forward.1} parent=0 // pred_fallthru
    _
  // Predicated region
  $region18: #{cvae_forward.1} parent=0 // pred_check
    _
  $region19: #{cvae_forward.1} parent=0 // pred_check_branch
    %30 = sbr.rel (0) target = $region21
  $region20: #{cvae_forward.1} parent=0 // pred_region
    _
  $region21: #{cvae_forward.1} parent=0 // pred_fallthru
    _
  // Predicated region
  $region22: #{cvae_forward.1} parent=0 // pred_check
    _
  $region23: #{cvae_forward.1} parent=0 // pred_check_branch
    %32 = sbr.rel (0) target = $region25
  $region24: #{cvae_forward.1} parent=0 // pred_region
    _
  $region25: #{cvae_forward.1} parent=0 // pred_fallthru
    _
  // Predicated region
  $region26: #{cvae_forward.1} parent=0 // pred_check
    _
  $region27: #{cvae_forward.1} parent=0 // pred_check_branch
    %34 = sbr.rel (0) target = $region29
  $region28: #{cvae_forward.1} parent=0 // pred_region
    _
  $region29: #{cvae_forward.1} parent=0 // pred_fallthru
    _
  // Predicated region
  $region30: #{cvae_forward.1} parent=0 // pred_check
    _
  $region31: #{cvae_forward.1} parent=0 // pred_check_branch
    %36 = sbr.rel (0) target = $region33
  $region32: #{cvae_forward.1} parent=0 // pred_region
    _
  $region33: #{cvae_forward.1} parent=0 // pred_fallthru
    _
  // Predicated region
  $region34: #{cvae_forward.1} parent=0 // pred_check
    _
  $region35: #{cvae_forward.1} parent=0 // pred_check_branch
    %38 = sbr.rel (0) target = $region37
  $region36: #{cvae_forward.1} parent=0 // pred_region
    _
  $region37: #{cvae_forward.1} parent=0 // pred_fallthru
    _
  // Predicated region
  $region38: #{cvae_forward.1} parent=0 // pred_check
    _
  $region39: #{cvae_forward.1} parent=0 // pred_check_branch
    %40 = sbr.rel (0) target = $region41
  $region40: #{cvae_forward.1} parent=0 // pred_region
    _
  $region41: #{cvae_forward.1} parent=0 // pred_fallthru
    _
  // Predicated region
  $region42: #{cvae_forward.1} parent=0 // pred_check
    _
  $region43: #{cvae_forward.1} parent=0 // pred_check_branch
    %42 = sbr.rel (0) target = $region45
  $region44: #{cvae_forward.1} parent=0 // pred_region
    _
  $region45: #{cvae_forward.1} parent=0 // pred_fallthru
    _
  // Predicated region
  $region46: #{cvae_forward.1} parent=0 // pred_check
    _
  $region47: #{cvae_forward.1} parent=0 // pred_check_branch
    %44 = sbr.rel (0) target = $region49
  $region48: #{cvae_forward.1} parent=0 // pred_region
    _
  $region49: #{cvae_forward.1} parent=0 // pred_fallthru
    _
  // Predicated region
  $region50: #{cvae_forward.1} parent=0 // pred_check
    _
  $region51: #{cvae_forward.1} parent=0 // pred_check_branch
    %46 = sbr.rel (0) target = $region53
  $region52: #{cvae_forward.1} parent=0 // pred_region
    _
  $region53: #{cvae_forward.1} parent=0 // pred_fallthru
    _
  %v47 = vld [vmem:[%s2] sm:$0xff]
  %v48 = vld [vmem:[%s3] sm:$0xff]
  %v49 = vld [vmem:[%s3 + $0x8] sm:$0x3]
  %v50 = vld [vmem:[%s4] sm:$0xff]
  %v51 = vld [vmem:[%s4 + $0x8] sm:$0x3]
  %vm52 = vcmp.eq.s32.totalorder %v47, 1
  %v53 = vsel %vm52, 1, 0
  %54 = vset.pattern.permute.xlu0 0
  %55 = vperm.xlu0 %54, %v53
  %v56 = vpop.permute.xlu0 %55
  %vm57 = vcmp.eq.s32.totalorder %v56, 1
  %v58 = vperm.slane %v48, 1
  %v59 = vperm.slane %v48, 0
  %v60 = vsel %vm57, %v58, %v59
  %v61 = vperm.slane %v50, 1
  %v62 = vperm.slane %v50, 0
  %v63 = vsel %vm57, %v61, %v62
  %vm64 = vcmp.eq.s32.totalorder %v47, 2
  %v65 = vsel %vm64, 1, 0
  %66 = vset.pattern.permute.xlu0 0
  %67 = vperm.xlu0 %66, %v65
  %v68 = vpop.permute.xlu0 %67
  %vm69 = vcmp.eq.s32.totalorder %v68, 1
  %v70 = vperm.slane %v48, 2
  %v71 = vsel %vm69, %v70, %v60
  %v72 = vperm.slane %v50, 2
  %v73 = vsel %vm69, %v72, %v63
  %vm74 = vcmp.eq.s32.totalorder %v47, 3
  %v75 = vsel %vm74, 1, 0
  %76 = vset.pattern.permute.xlu0 0
  %77 = vperm.xlu0 %76, %v75
  %v78 = vpop.permute.xlu0 %77
  %vm79 = vcmp.eq.s32.totalorder %v78, 1
  %v80 = vperm.slane %v48, 3
  %v81 = vsel %vm79, %v80, %v71
  %v82 = vperm.slane %v50, 3
  %v83 = vsel %vm79, %v82, %v73
  %vm84 = vcmp.eq.s32.totalorder %v47, 4
  %v85 = vsel %vm84, 1, 0
  %86 = vset.pattern.permute.xlu0 0
  %87 = vperm.xlu0 %86, %v85
  %v88 = vpop.permute.xlu0 %87
  %vm89 = vcmp.eq.s32.totalorder %v88, 1
  %v90 = vperm.slane %v48, 4
  %v91 = vsel %vm89, %v90, %v81
  %v92 = vperm.slane %v50, 4
  %v93 = vsel %vm89, %v92, %v83
  %vm94 = vcmp.eq.s32.totalorder %v47, 5
  %v95 = vsel %vm94, 1, 0
  %96 = vset.pattern.permute.xlu0 0
  %97 = vperm.xlu0 %96, %v95
  %v98 = vpop.permute.xlu0 %97
  %vm99 = vcmp.eq.s32.totalorder %v98, 1
  %v100 = vperm.slane %v48, 5
  %v101 = vsel %vm99, %v100, %v91
  %v102 = vperm.slane %v50, 5
  %v103 = vsel %vm99, %v102, %v93
  %vm104 = vcmp.eq.s32.totalorder %v47, 6
  %v105 = vsel %vm104, 1, 0
  %106 = vset.pattern.permute.xlu0 0
  %107 = vperm.xlu0 %106, %v105
  %v108 = vpop.permute.xlu0 %107
  %vm109 = vcmp.eq.s32.totalorder %v108, 1
  %v110 = vperm.slane %v48, 6
  %v111 = vsel %vm109, %v110, %v101
  %v112 = vperm.slane %v50, 6
  %v113 = vsel %vm109, %v112, %v103
  %vm114 = vcmp.eq.s32.totalorder %v47, 7
  %v115 = vsel %vm114, 1, 0
  %116 = vset.pattern.permute.xlu0 0
  %117 = vperm.xlu0 %116, %v115
  %v118 = vpop.permute.xlu0 %117
  %vm119 = vcmp.eq.s32.totalorder %v118, 1
  %v120 = vperm.slane %v48, 7
  %v121 = vsel %vm119, %v120, %v111
  %v122 = vperm.slane %v50, 7
  %v123 = vsel %vm119, %v122, %v113
  %vm124 = vcmp.eq.s32.totalorder %v47, 8
  %v125 = vsel %vm124, 1, 0
  %126 = vset.pattern.permute.xlu0 0
  %127 = vperm.xlu0 %126, %v125
  %v128 = vpop.permute.xlu0 %127
  %vm129 = vcmp.eq.s32.totalorder %v128, 1
  %v130 = vperm.slane %v49, 0
  %v131 = vsel %vm129, %v130, %v121
  %v132 = vperm.slane %v51, 0
  %v133 = vsel %vm129, %v132, %v123
  %vm134 = vcmp.eq.s32.totalorder %v47, 9
  %v135 = vsel %vm134, 1, 0
  %136 = vset.pattern.permute.xlu0 0
  %137 = vperm.xlu0 %136, %v135
  %v138 = vpop.permute.xlu0 %137
  %vm139 = vcmp.eq.s32.totalorder %v138, 1
  %v140 = vperm.slane %v49, 1
  %v141 = vsel %vm139, %v140, %v131
  %v142 = vperm.slane %v51, 1
  %v143 = vsel %vm139, %v142, %v133
  %v144 = vld [vmem:[%s0] sm:$0xff]
  %v145 = vld [vmem:[%s0 + $0x8] sm:$0xff]
  %v146 = vld [vmem:[%s0 + $0x10] sm:$0xff]
  %v147 = vld [vmem:[%s0 + $0x18] sm:$0xff]
  %v148 = vld [vmem:[%s0 + $0x20] sm:$0xff]
  %v149 = vld [vmem:[%s0 + $0x28] sm:$0xff]
  %v150 = vld [vmem:[%s0 + $0x30] sm:$0xff]
  %v151 = vld [vmem:[%s5] sm:$0xff]
  %v152 = vld [vmem:[%s5 + $0x8] sm:$0xff]
  %v153 = vld [vmem:[%s5 + $0x10] sm:$0xff]
  %v154 = vld [vmem:[%s5 + $0x18] sm:$0xff]
  %v155 = vld [vmem:[%s5 + $0x20] sm:$0xff]
  %v156 = vld [vmem:[%s5 + $0x28] sm:$0xff]
  %v157 = vld [vmem:[%s5 + $0x30] sm:$0xff]
  %v158 = vld [vmem:[%s5 + $0x38] sm:$0xff]
  %v159 = vld [vmem:[%s5 + $0x40] sm:$0xff]
  %v160 = vld [vmem:[%s5 + $0x48] sm:$0xff]
  %v161 = vld [vmem:[%s5 + $0x50] sm:$0xff]
  %v162 = vld [vmem:[%s5 + $0x58] sm:$0xff]
  %v163 = vld [vmem:[%s5 + $0x60] sm:$0xff]
  %v164 = vld [vmem:[%s5 + $0x68] sm:$0xff]
  %v165 = vld [vmem:[%s5 + $0x70] sm:$0xff]
  %v166 = vld [vmem:[%s5 + $0x78] sm:$0xff]
  %v167 = vld [vmem:[%s5 + $0x80] sm:$0xff]
  %v168 = vld [vmem:[%s5 + $0x88] sm:$0xff]
  %v169 = vld [vmem:[%s5 + $0x90] sm:$0xff]
  %v170 = vld [vmem:[%s5 + $0x98] sm:$0xff]
  %v171 = vld [vmem:[%s5 + $0xa0] sm:$0xff]
  %v172 = vld [vmem:[%s5 + $0xa8] sm:$0xff]
  %v173 = vld [vmem:[%s5 + $0xb0] sm:$0xff]
  %v174 = vld [vmem:[%s5 + $0xb8] sm:$0xff]
  %v175 = vld [vmem:[%s5 + $0xc0] sm:$0xff]
  %v176 = vld [vmem:[%s5 + $0xc8] sm:$0xff]
  %v177 = vld [vmem:[%s5 + $0xd0] sm:$0xff]
  %v178 = vld [vmem:[%s5 + $0xd8] sm:$0xff]
  %v179 = vld [vmem:[%s5 + $0xe0] sm:$0xff]
  %v180 = vld [vmem:[%s5 + $0xe8] sm:$0xff]
  %v181 = vld [vmem:[%s5 + $0xf0] sm:$0xff]
  %v182 = vld [vmem:[%s5 + $0xf8] sm:$0xff]
  %v183 = vld [vmem:[%s5 + $0x100] sm:$0xff]
  %v184 = vld [vmem:[%s5 + $0x108] sm:$0xff]
  %v185 = vld [vmem:[%s5 + $0x110] sm:$0xff]
  %v186 = vld [vmem:[%s5 + $0x118] sm:$0xff]
  %v187 = vld [vmem:[%s5 + $0x120] sm:$0xff]
  %v188 = vld [vmem:[%s5 + $0x128] sm:$0xff]
  %v189 = vld [vmem:[%s5 + $0x130] sm:$0xff]
  %v190 = vld [vmem:[%s5 + $0x138] sm:$0xff]
  %v191 = vld [vmem:[%s5 + $0x140] sm:$0xff]
  %v192 = vld [vmem:[%s5 + $0x148] sm:$0xff]
  %v193 = vld [vmem:[%s5 + $0x150] sm:$0xff]
  %v194 = vld [vmem:[%s5 + $0x158] sm:$0xff]
  %v195 = vld [vmem:[%s5 + $0x160] sm:$0xff]
  %v196 = vld [vmem:[%s5 + $0x168] sm:$0xff]
  %v197 = vld [vmem:[%s5 + $0x170] sm:$0xff]
  %v198 = vld [vmem:[%s5 + $0x178] sm:$0xff]
  %v199 = vld [vmem:[%s5 + $0x180] sm:$0xff]
  %v200 = vld [vmem:[%s5 + $0x188] sm:$0xff]
  %v201 = vld [vmem:[%s5 + $0x190] sm:$0xff]
  %v202 = vld [vmem:[%s5 + $0x198] sm:$0xff]
  %v203 = vld [vmem:[%s5 + $0x1a0] sm:$0xff]
  %v204 = vld [vmem:[%s5 + $0x1a8] sm:$0xff]
  %v205 = vld [vmem:[%s5 + $0x1b0] sm:$0xff]
  %v206 = vld [vmem:[%s5 + $0x1b8] sm:$0xff]
  %v207 = vld [vmem:[%s5 + $0x1c0] sm:$0xff]
  %v208 = vld [vmem:[%s5 + $0x1c8] sm:$0xff]
  %v209 = vld [vmem:[%s5 + $0x1d0] sm:$0xff]
  %v210 = vld [vmem:[%s5 + $0x1d8] sm:$0xff]
  %v211 = vld [vmem:[%s5 + $0x1e0] sm:$0xff]
  %v212 = vld [vmem:[%s5 + $0x1e8] sm:$0xff]
  %v213 = vld [vmem:[%s5 + $0x1f0] sm:$0xff]
  %v214 = vld [vmem:[%s5 + $0x1f8] sm:$0xff]
  %v215 = vld [vmem:[%s5 + $0x200] sm:$0xff]
  %v216 = vld [vmem:[%s5 + $0x208] sm:$0xff]
  %v217 = vld [vmem:[%s5 + $0x210] sm:$0xff]
  %v218 = vld [vmem:[%s5 + $0x218] sm:$0xff]
  %v219 = vld [vmem:[%s5 + $0x220] sm:$0xff]
  %v220 = vld [vmem:[%s5 + $0x228] sm:$0xff]
  %v221 = vld [vmem:[%s5 + $0x230] sm:$0xff]
  %v222 = vld [vmem:[%s5 + $0x238] sm:$0xff]
  %v223 = vld [vmem:[%s5 + $0x240] sm:$0xff]
  %v224 = vld [vmem:[%s5 + $0x248] sm:$0xff]
  %v225 = vld [vmem:[%s5 + $0x250] sm:$0xff]
  %v226 = vld [vmem:[%s5 + $0x258] sm:$0xff]
  %v227 = vld [vmem:[%s5 + $0x260] sm:$0xff]
  %v228 = vld [vmem:[%s5 + $0x268] sm:$0xff]
  %v229 = vld [vmem:[%s5 + $0x270] sm:$0xff]
  %v230 = vld [vmem:[%s5 + $0x278] sm:$0xff]
  %v231 = vld [vmem:[%s5 + $0x280] sm:$0xff]
  %v232 = vld [vmem:[%s5 + $0x288] sm:$0xff]
  %v233 = vld [vmem:[%s5 + $0x290] sm:$0xff]
  %v234 = vld [vmem:[%s5 + $0x298] sm:$0xff]
  %v235 = vld [vmem:[%s5 + $0x2a0] sm:$0xff]
  %v236 = vld [vmem:[%s5 + $0x2a8] sm:$0xff]
  %v237 = vld [vmem:[%s5 + $0x2b0] sm:$0xff]
  %v238 = vld [vmem:[%s5 + $0x2b8] sm:$0xff]
  %v239 = vld [vmem:[%s5 + $0x2c0] sm:$0xff]
  %v240 = vld [vmem:[%s5 + $0x2c8] sm:$0xff]
  %v241 = vld [vmem:[%s5 + $0x2d0] sm:$0xff]
  %v242 = vld [vmem:[%s5 + $0x2d8] sm:$0xff]
  %v243 = vld [vmem:[%s5 + $0x2e0] sm:$0xff]
  %v244 = vld [vmem:[%s5 + $0x2e8] sm:$0xff]
  %v245 = vld [vmem:[%s5 + $0x2f0] sm:$0xff]
  %v246 = vld [vmem:[%s5 + $0x2f8] sm:$0xff]
  %v247 = vld [vmem:[%s5 + $0x300] sm:$0xff]
  %v248 = vld [vmem:[%s5 + $0x308] sm:$0xff]
  %vm249 = vcmask 130048
  %v251 = vsel %vm249, %v150, 0
  %253 = vmatpush.msra.mxu0 %v166
  %254 = vmatpush.msra.mxu0 %v165
  %255 = vmatpush.msra.mxu0 %v164
  %256 = vmatpush.msra.mxu0 %v163
  %257 = vmatpush.msra.mxu0 %v162
  %258 = vmatpush.msra.mxu0 %v161
  %259 = vmatpush.msra.mxu0 %v160
  %260 = vmatpush.msra.mxu0 %v159
  %261 = vmatpush.msra.mxu0 %v158
  %262 = vmatpush.msra.mxu0 %v157
  %263 = vmatpush.msra.mxu0 %v156
  %264 = vmatpush.msra.mxu0 %v155
  %265 = vmatpush.msra.mxu0 %v154
  %266 = vmatpush.msra.mxu0 %v153
  %267 = vmatpush.msra.mxu0 %v152
  %268 = vmatpush.msra.mxu0 %v151
  %269 = vmatmul.f32.gmra.mxu0 %v144
  %v270 = vpop.f32.mrf.mxu0
  %v271 = vadd.f32 %v141, %v270
  %272 = vdwg.mxu0
  %273 = vmatpush.msra.mxu0 %v182
  %274 = vmatpush.msra.mxu0 %v181
  %275 = vmatpush.msra.mxu0 %v180
  %276 = vmatpush.msra.mxu0 %v179
  %277 = vmatpush.msra.mxu0 %v178
  %278 = vmatpush.msra.mxu0 %v177
  %279 = vmatpush.msra.mxu0 %v176
  %280 = vmatpush.msra.mxu0 %v175
  %281 = vmatpush.msra.mxu0 %v174
  %282 = vmatpush.msra.mxu0 %v173
  %283 = vmatpush.msra.mxu0 %v172
  %284 = vmatpush.msra.mxu0 %v171
  %285 = vmatpush.msra.mxu0 %v170
  %286 = vmatpush.msra.mxu0 %v169
  %287 = vmatpush.msra.mxu0 %v168
  %288 = vmatpush.msra.mxu0 %v167
  %289 = vmatmul.f32.gmra.mxu0 %v145
  %v290 = vpop.f32.mrf.mxu0
  %v291 = vadd.f32 %v271, %v290
  %292 = vdwg.mxu0
  %293 = vmatpush.msra.mxu0 %v198
  %294 = vmatpush.msra.mxu0 %v197
  %295 = vmatpush.msra.mxu0 %v196
  %296 = vmatpush.msra.mxu0 %v195
  %297 = vmatpush.msra.mxu0 %v194
  %298 = vmatpush.msra.mxu0 %v193
  %299 = vmatpush.msra.mxu0 %v192
  %300 = vmatpush.msra.mxu0 %v191
  %301 = vmatpush.msra.mxu0 %v190
  %302 = vmatpush.msra.mxu0 %v189
  %303 = vmatpush.msra.mxu0 %v188
  %304 = vmatpush.msra.mxu0 %v187
  %305 = vmatpush.msra.mxu0 %v186
  %306 = vmatpush.msra.mxu0 %v185
  %307 = vmatpush.msra.mxu0 %v184
  %308 = vmatpush.msra.mxu0 %v183
  %309 = vmatmul.f32.gmra.mxu0 %v146
  %v310 = vpop.f32.mrf.mxu0
  %v311 = vadd.f32 %v291, %v310
  %312 = vdwg.mxu0
  %313 = vmatpush.msra.mxu0 %v214
  %314 = vmatpush.msra.mxu0 %v213
  %315 = vmatpush.msra.mxu0 %v212
  %316 = vmatpush.msra.mxu0 %v211
  %317 = vmatpush.msra.mxu0 %v210
  %318 = vmatpush.msra.mxu0 %v209
  %319 = vmatpush.msra.mxu0 %v208
  %320 = vmatpush.msra.mxu0 %v207
  %321 = vmatpush.msra.mxu0 %v206
  %322 = vmatpush.msra.mxu0 %v205
  %323 = vmatpush.msra.mxu0 %v204
  %324 = vmatpush.msra.mxu0 %v203
  %325 = vmatpush.msra.mxu0 %v202
  %326 = vmatpush.msra.mxu0 %v201
  %327 = vmatpush.msra.mxu0 %v200
  %328 = vmatpush.msra.mxu0 %v199
  %329 = vmatmul.f32.gmra.mxu0 %v147
  %v330 = vpop.f32.mrf.mxu0
  %v331 = vadd.f32 %v311, %v330
  %332 = vdwg.mxu0
  %333 = vmatpush.msra.mxu0 %v230
  %334 = vmatpush.msra.mxu0 %v229
  %335 = vmatpush.msra.mxu0 %v228
  %336 = vmatpush.msra.mxu0 %v227
  %337 = vmatpush.msra.mxu0 %v226
  %338 = vmatpush.msra.mxu0 %v225
  %339 = vmatpush.msra.mxu0 %v224
  %340 = vmatpush.msra.mxu0 %v223
  %341 = vmatpush.msra.mxu0 %v222
  %342 = vmatpush.msra.mxu0 %v221
  %343 = vmatpush.msra.mxu0 %v220
  %344 = vmatpush.msra.mxu0 %v219
  %345 = vmatpush.msra.mxu0 %v218
  %346 = vmatpush.msra.mxu0 %v217
  %347 = vmatpush.msra.mxu0 %v216
  %348 = vmatpush.msra.mxu0 %v215
  %349 = vmatmul.f32.gmra.mxu0 %v148
  %v350 = vpop.f32.mrf.mxu0
  %v351 = vadd.f32 %v331, %v350
  %352 = vdwg.mxu0
  %353 = vmatpush.msra.mxu0 %v246
  %354 = vmatpush.msra.mxu0 %v245
  %355 = vmatpush.msra.mxu0 %v244
  %356 = vmatpush.msra.mxu0 %v243
  %357 = vmatpush.msra.mxu0 %v242
  %358 = vmatpush.msra.mxu0 %v241
  %359 = vmatpush.msra.mxu0 %v240
  %360 = vmatpush.msra.mxu0 %v239
  %361 = vmatpush.msra.mxu0 %v238
  %362 = vmatpush.msra.mxu0 %v237
  %363 = vmatpush.msra.mxu0 %v236
  %364 = vmatpush.msra.mxu0 %v235
  %365 = vmatpush.msra.mxu0 %v234
  %366 = vmatpush.msra.mxu0 %v233
  %367 = vmatpush.msra.mxu0 %v232
  %368 = vmatpush.msra.mxu0 %v231
  %369 = vmatmul.f32.gmra.mxu0 %v149
  %v370 = vpop.f32.mrf.mxu0
  %v371 = vadd.f32 %v351, %v370
  %372 = vdwg.mxu0
  %373 = vmatpush.msra.mxu0 0.0
  %374 = vmatpush.msra.mxu0 0.0
  %375 = vmatpush.msra.mxu0 0.0
  %376 = vmatpush.msra.mxu0 0.0
  %377 = vmatpush.msra.mxu0 0.0
  %378 = vmatpush.msra.mxu0 0.0
  %379 = vmatpush.msra.mxu0 0.0
  %380 = vmatpush.msra.mxu0 0.0
  %381 = vmatpush.msra.mxu0 0.0
  %382 = vmatpush.msra.mxu0 0.0
  %383 = vmatpush.msra.mxu0 0.0
  %384 = vmatpush.msra.mxu0 0.0
  %385 = vmatpush.msra.mxu0 0.0
  %386 = vmatpush.msra.mxu0 0.0
  %387 = vmatpush.msra.mxu0 %v248
  %388 = vmatpush.msra.mxu0 %v247
  %389 = vmatmul.f32.gmra.mxu0 %v251
  %v390 = vpop.f32.mrf.mxu0
  %v391 = vadd.f32 %v371, %v390
  %392 = vdwg.mxu0
  %v393 = vmax.f32 %v391, 0.0
  %v394 = vld [vmem:[%s6] sm:$0xff]
  %v395 = vld [vmem:[%s6 + $0x8] sm:$0xff]
  %v396 = vld [vmem:[%s6 + $0x10] sm:$0xff]
  %v397 = vld [vmem:[%s6 + $0x18] sm:$0xff]
  %v398 = vld [vmem:[%s6 + $0x20] sm:$0xff]
  %v399 = vld [vmem:[%s6 + $0x28] sm:$0xff]
  %v400 = vld [vmem:[%s6 + $0x30] sm:$0xff]
  %v401 = vld [vmem:[%s6 + $0x38] sm:$0xff]
  %v402 = vld [vmem:[%s6 + $0x40] sm:$0xff]
  %v403 = vld [vmem:[%s6 + $0x48] sm:$0xff]
  %v404 = vld [vmem:[%s6 + $0x50] sm:$0xff]
  %v405 = vld [vmem:[%s6 + $0x58] sm:$0xff]
  %v406 = vld [vmem:[%s6 + $0x60] sm:$0xff]
  %v407 = vld [vmem:[%s6 + $0x68] sm:$0xff]
  %v408 = vld [vmem:[%s6 + $0x70] sm:$0xff]
  %v409 = vld [vmem:[%s6 + $0x78] sm:$0xff]
  %v410 = vld [vmem:[%s7] sm:$0x1]
  %v412 = vperm.slane %v410, 0
  %414 = vmatpush.msra.mxu0 %v409
  %415 = vmatpush.msra.mxu0 %v408
  %416 = vmatpush.msra.mxu0 %v407
  %417 = vmatpush.msra.mxu0 %v406
  %418 = vmatpush.msra.mxu0 %v405
  %419 = vmatpush.msra.mxu0 %v404
  %420 = vmatpush.msra.mxu0 %v403
  %421 = vmatpush.msra.mxu0 %v402
  %422 = vmatpush.msra.mxu0 %v401
  %423 = vmatpush.msra.mxu0 %v400
  %424 = vmatpush.msra.mxu0 %v399
  %425 = vmatpush.msra.mxu0 %v398
  %426 = vmatpush.msra.mxu0 %v397
  %427 = vmatpush.msra.mxu0 %v396
  %428 = vmatpush.msra.mxu0 %v395
  %429 = vmatpush.msra.mxu0 %v394
  %430 = vmatmul.f32.gmra.mxu0 %v393
  %v431 = vpop.f32.mrf.mxu0
  %v432 = vadd.f32 %v412, %v431
  %433 = vdwg.mxu0
  %v434 = vld [vmem:[%s8] sm:$0xff]
  %v435 = vld [vmem:[%s8 + $0x8] sm:$0xff]
  %v436 = vld [vmem:[%s8 + $0x10] sm:$0xff]
  %v437 = vld [vmem:[%s8 + $0x18] sm:$0xff]
  %v438 = vld [vmem:[%s8 + $0x20] sm:$0xff]
  %v439 = vld [vmem:[%s8 + $0x28] sm:$0xff]
  %v440 = vld [vmem:[%s8 + $0x30] sm:$0xff]
  %v441 = vld [vmem:[%s8 + $0x38] sm:$0xff]
  %v442 = vld [vmem:[%s8 + $0x40] sm:$0xff]
  %v443 = vld [vmem:[%s8 + $0x48] sm:$0xff]
  %v444 = vld [vmem:[%s8 + $0x50] sm:$0xff]
  %v445 = vld [vmem:[%s8 + $0x58] sm:$0xff]
  %v446 = vld [vmem:[%s8 + $0x60] sm:$0xff]
  %v447 = vld [vmem:[%s8 + $0x68] sm:$0xff]
  %v448 = vld [vmem:[%s8 + $0x70] sm:$0xff]
  %v449 = vld [vmem:[%s8 + $0x78] sm:$0xff]
  %v450 = vld [vmem:[%s9] sm:$0x1]
  %v452 = vperm.slane %v450, 0
  %454 = vmatpush.msra.mxu0 %v449
  %455 = vmatpush.msra.mxu0 %v448
  %456 = vmatpush.msra.mxu0 %v447
  %457 = vmatpush.msra.mxu0 %v446
  %458 = vmatpush.msra.mxu0 %v445
  %459 = vmatpush.msra.mxu0 %v444
  %460 = vmatpush.msra.mxu0 %v443
  %461 = vmatpush.msra.mxu0 %v442
  %462 = vmatpush.msra.mxu0 %v441
  %463 = vmatpush.msra.mxu0 %v440
  %464 = vmatpush.msra.mxu0 %v439
  %465 = vmatpush.msra.mxu0 %v438
  %466 = vmatpush.msra.mxu0 %v437
  %467 = vmatpush.msra.mxu0 %v436
  %468 = vmatpush.msra.mxu0 %v435
  %469 = vmatpush.msra.mxu0 %v434
  %470 = vmatmul.f32.gmra.mxu0 %v393
  %v471 = vpop.f32.mrf.mxu0
  %v472 = vadd.f32 %v452, %v471
  %473 = vdwg.mxu0
  %vm474 = vcmask 23552
  %475 = vst.msk [vmem:[%s13] sm:$0xff] %vm474, %v432
  %476 = vst.msk [vmem:[%s14] sm:$0xff] %vm474, %v472
  %v477 = vld [vmem:[%s1] sm:$0xff]
  %v478 = vmul.f32 %v472, 0.5
  %v479 = vmul.f32 %v478, 1.442695
  %v480 = vpow.pop %v479
  %v481 = vmul.f32 %v477, %v480
  %v482 = vadd.f32 %v432, %v481
  %v483 = vld [vmem:[%s10] sm:$0x7]
  %485 = vset.pattern.permute.xlu0 0
  %486 = vperm.xlu0 %485, %v482
  %v487 = vpop.permute.xlu0 %486
  %v489 = vperm.slane %v483, 0
  %v490 = vmul.f32 %v487, %v489
  %v491 = vadd.f32 %v143, %v490
  %492 = vset.pattern.permute.xlu0 1
  %493 = vperm.xlu0 %492, %v482
  %v494 = vpop.permute.xlu0 %493
  %v496 = vperm.slane %v483, 1
  %v497 = vmul.f32 %v494, %v496
  %v498 = vadd.f32 %v491, %v497
  %499 = vset.pattern.permute.xlu0 2
  %500 = vperm.xlu0 %499, %v482
  %v501 = vpop.permute.xlu0 %500
  %v503 = vperm.slane %v483, 2
  %v504 = vmul.f32 %v501, %v503
  %v505 = vadd.f32 %v498, %v504
  %v506 = vmax.f32 %v505, 0.0
  %v507 = vld [vmem:[%s11] sm:$0xff]
  %v508 = vld [vmem:[%s11 + $0x8] sm:$0xff]
  %v509 = vld [vmem:[%s11 + $0x10] sm:$0xff]
  %v510 = vld [vmem:[%s11 + $0x18] sm:$0xff]
  %v511 = vld [vmem:[%s11 + $0x20] sm:$0xff]
  %v512 = vld [vmem:[%s11 + $0x28] sm:$0xff]
  %v513 = vld [vmem:[%s11 + $0x30] sm:$0xff]
  %v514 = vld [vmem:[%s11 + $0x38] sm:$0xff]
  %v515 = vld [vmem:[%s11 + $0x40] sm:$0xff]
  %v516 = vld [vmem:[%s11 + $0x48] sm:$0xff]
  %v517 = vld [vmem:[%s11 + $0x50] sm:$0xff]
  %v518 = vld [vmem:[%s11 + $0x58] sm:$0xff]
  %v519 = vld [vmem:[%s11 + $0x60] sm:$0xff]
  %v520 = vld [vmem:[%s11 + $0x68] sm:$0xff]
  %v521 = vld [vmem:[%s11 + $0x70] sm:$0xff]
  %v522 = vld [vmem:[%s11 + $0x78] sm:$0xff]
  %v523 = vld [vmem:[%s11 + $0x80] sm:$0xff]
  %v524 = vld [vmem:[%s11 + $0x88] sm:$0xff]
  %v525 = vld [vmem:[%s11 + $0x90] sm:$0xff]
  %v526 = vld [vmem:[%s11 + $0x98] sm:$0xff]
  %v527 = vld [vmem:[%s11 + $0xa0] sm:$0xff]
  %v528 = vld [vmem:[%s11 + $0xa8] sm:$0xff]
  %v529 = vld [vmem:[%s11 + $0xb0] sm:$0xff]
  %v530 = vld [vmem:[%s11 + $0xb8] sm:$0xff]
  %v531 = vld [vmem:[%s11 + $0xc0] sm:$0xff]
  %v532 = vld [vmem:[%s11 + $0xc8] sm:$0xff]
  %v533 = vld [vmem:[%s11 + $0xd0] sm:$0xff]
  %v534 = vld [vmem:[%s11 + $0xd8] sm:$0xff]
  %v535 = vld [vmem:[%s11 + $0xe0] sm:$0xff]
  %v536 = vld [vmem:[%s11 + $0xe8] sm:$0xff]
  %v537 = vld [vmem:[%s11 + $0xf0] sm:$0xff]
  %v538 = vld [vmem:[%s11 + $0xf8] sm:$0xff]
  %v539 = vld [vmem:[%s11 + $0x100] sm:$0xff]
  %v540 = vld [vmem:[%s11 + $0x108] sm:$0xff]
  %v541 = vld [vmem:[%s11 + $0x110] sm:$0xff]
  %v542 = vld [vmem:[%s11 + $0x118] sm:$0xff]
  %v543 = vld [vmem:[%s11 + $0x120] sm:$0xff]
  %v544 = vld [vmem:[%s11 + $0x128] sm:$0xff]
  %v545 = vld [vmem:[%s11 + $0x130] sm:$0xff]
  %v546 = vld [vmem:[%s11 + $0x138] sm:$0xff]
  %v547 = vld [vmem:[%s11 + $0x140] sm:$0xff]
  %v548 = vld [vmem:[%s11 + $0x148] sm:$0xff]
  %v549 = vld [vmem:[%s11 + $0x150] sm:$0xff]
  %v550 = vld [vmem:[%s11 + $0x158] sm:$0xff]
  %v551 = vld [vmem:[%s11 + $0x160] sm:$0xff]
  %v552 = vld [vmem:[%s11 + $0x168] sm:$0xff]
  %v553 = vld [vmem:[%s11 + $0x170] sm:$0xff]
  %v554 = vld [vmem:[%s11 + $0x178] sm:$0xff]
  %v555 = vld [vmem:[%s11 + $0x180] sm:$0xff]
  %v556 = vld [vmem:[%s11 + $0x188] sm:$0xff]
  %v557 = vld [vmem:[%s11 + $0x190] sm:$0xff]
  %v558 = vld [vmem:[%s11 + $0x198] sm:$0xff]
  %v559 = vld [vmem:[%s11 + $0x1a0] sm:$0xff]
  %v560 = vld [vmem:[%s11 + $0x1a8] sm:$0xff]
  %v561 = vld [vmem:[%s11 + $0x1b0] sm:$0xff]
  %v562 = vld [vmem:[%s11 + $0x1b8] sm:$0xff]
  %v563 = vld [vmem:[%s11 + $0x1c0] sm:$0xff]
  %v564 = vld [vmem:[%s11 + $0x1c8] sm:$0xff]
  %v565 = vld [vmem:[%s11 + $0x1d0] sm:$0xff]
  %v566 = vld [vmem:[%s11 + $0x1d8] sm:$0xff]
  %v567 = vld [vmem:[%s11 + $0x1e0] sm:$0xff]
  %v568 = vld [vmem:[%s11 + $0x1e8] sm:$0xff]
  %v569 = vld [vmem:[%s11 + $0x1f0] sm:$0xff]
  %v570 = vld [vmem:[%s11 + $0x1f8] sm:$0xff]
  %v571 = vld [vmem:[%s11 + $0x200] sm:$0xff]
  %v572 = vld [vmem:[%s11 + $0x208] sm:$0xff]
  %v573 = vld [vmem:[%s11 + $0x210] sm:$0xff]
  %v574 = vld [vmem:[%s11 + $0x218] sm:$0xff]
  %v575 = vld [vmem:[%s11 + $0x220] sm:$0xff]
  %v576 = vld [vmem:[%s11 + $0x228] sm:$0xff]
  %v577 = vld [vmem:[%s11 + $0x230] sm:$0xff]
  %v578 = vld [vmem:[%s11 + $0x238] sm:$0xff]
  %v579 = vld [vmem:[%s11 + $0x240] sm:$0xff]
  %v580 = vld [vmem:[%s11 + $0x248] sm:$0xff]
  %v581 = vld [vmem:[%s11 + $0x250] sm:$0xff]
  %v582 = vld [vmem:[%s11 + $0x258] sm:$0xff]
  %v583 = vld [vmem:[%s11 + $0x260] sm:$0xff]
  %v584 = vld [vmem:[%s11 + $0x268] sm:$0xff]
  %v585 = vld [vmem:[%s11 + $0x270] sm:$0xff]
  %v586 = vld [vmem:[%s11 + $0x278] sm:$0xff]
  %v587 = vld [vmem:[%s11 + $0x280] sm:$0xff]
  %v588 = vld [vmem:[%s11 + $0x288] sm:$0xff]
  %v589 = vld [vmem:[%s11 + $0x290] sm:$0xff]
  %v590 = vld [vmem:[%s11 + $0x298] sm:$0xff]
  %v591 = vld [vmem:[%s11 + $0x2a0] sm:$0xff]
  %v592 = vld [vmem:[%s11 + $0x2a8] sm:$0xff]
  %v593 = vld [vmem:[%s11 + $0x2b0] sm:$0xff]
  %v594 = vld [vmem:[%s11 + $0x2b8] sm:$0xff]
  %v595 = vld [vmem:[%s11 + $0x2c0] sm:$0xff]
  %v596 = vld [vmem:[%s11 + $0x2c8] sm:$0xff]
  %v597 = vld [vmem:[%s11 + $0x2d0] sm:$0xff]
  %v598 = vld [vmem:[%s11 + $0x2d8] sm:$0xff]
  %v599 = vld [vmem:[%s11 + $0x2e0] sm:$0xff]
  %v600 = vld [vmem:[%s11 + $0x2e8] sm:$0xff]
  %v601 = vld [vmem:[%s11 + $0x2f0] sm:$0xff]
  %v602 = vld [vmem:[%s11 + $0x2f8] sm:$0xff]
  %v603 = vld [vmem:[%s11 + $0x300] sm:$0xff]
  %v604 = vld [vmem:[%s11 + $0x308] sm:$0xff]
  %v605 = vld [vmem:[%s11 + $0x310] sm:$0xff]
  %v606 = vld [vmem:[%s11 + $0x318] sm:$0xff]
  %v607 = vld [vmem:[%s11 + $0x320] sm:$0xff]
  %v608 = vld [vmem:[%s11 + $0x328] sm:$0xff]
  %v609 = vld [vmem:[%s11 + $0x330] sm:$0xff]
  %v610 = vld [vmem:[%s11 + $0x338] sm:$0xff]
  %v611 = vld [vmem:[%s11 + $0x340] sm:$0xff]
  %v612 = vld [vmem:[%s11 + $0x348] sm:$0xff]
  %v613 = vld [vmem:[%s11 + $0x350] sm:$0xff]
  %v614 = vld [vmem:[%s11 + $0x358] sm:$0xff]
  %v615 = vld [vmem:[%s11 + $0x360] sm:$0xff]
  %v616 = vld [vmem:[%s11 + $0x368] sm:$0xff]
  %v617 = vld [vmem:[%s11 + $0x370] sm:$0xff]
  %v618 = vld [vmem:[%s11 + $0x378] sm:$0xff]
  %v619 = vld [vmem:[%s12] sm:$0x7f]
  %v621 = vperm.slane %v619, 0
  %v622 = vperm.slane %v619, 1
  %v623 = vperm.slane %v619, 2
  %v624 = vperm.slane %v619, 3
  %v625 = vperm.slane %v619, 4
  %v626 = vperm.slane %v619, 5
  %v627 = vperm.slane %v619, 6
  %635 = vmatpush.msra.mxu0 %v612
  %636 = vmatpush.msra.mxu0 %v605
  %637 = vmatpush.msra.mxu0 %v598
  %638 = vmatpush.msra.mxu0 %v591
  %639 = vmatpush.msra.mxu0 %v584
  %640 = vmatpush.msra.mxu0 %v577
  %641 = vmatpush.msra.mxu0 %v570
  %642 = vmatpush.msra.mxu0 %v563
  %643 = vmatpush.msra.mxu0 %v556
  %644 = vmatpush.msra.mxu0 %v549
  %645 = vmatpush.msra.mxu0 %v542
  %646 = vmatpush.msra.mxu0 %v535
  %647 = vmatpush.msra.mxu0 %v528
  %648 = vmatpush.msra.mxu0 %v521
  %649 = vmatpush.msra.mxu0 %v514
  %650 = vmatpush.msra.mxu0 %v507
  %651 = vmatmul.f32.gmra.mxu0 %v506
  %v652 = vpop.f32.mrf.mxu0
  %v653 = vadd.f32 %v621, %v652
  %654 = vdwg.mxu0
  %655 = vmatpush.msra.mxu0 %v613
  %656 = vmatpush.msra.mxu0 %v606
  %657 = vmatpush.msra.mxu0 %v599
  %658 = vmatpush.msra.mxu0 %v592
  %659 = vmatpush.msra.mxu0 %v585
  %660 = vmatpush.msra.mxu0 %v578
  %661 = vmatpush.msra.mxu0 %v571
  %662 = vmatpush.msra.mxu0 %v564
  %663 = vmatpush.msra.mxu0 %v557
  %664 = vmatpush.msra.mxu0 %v550
  %665 = vmatpush.msra.mxu0 %v543
  %666 = vmatpush.msra.mxu0 %v536
  %667 = vmatpush.msra.mxu0 %v529
  %668 = vmatpush.msra.mxu0 %v522
  %669 = vmatpush.msra.mxu0 %v515
  %670 = vmatpush.msra.mxu0 %v508
  %671 = vmatmul.f32.gmra.mxu0 %v506
  %v672 = vpop.f32.mrf.mxu0
  %v673 = vadd.f32 %v622, %v672
  %674 = vdwg.mxu0
  %675 = vmatpush.msra.mxu0 %v614
  %676 = vmatpush.msra.mxu0 %v607
  %677 = vmatpush.msra.mxu0 %v600
  %678 = vmatpush.msra.mxu0 %v593
  %679 = vmatpush.msra.mxu0 %v586
  %680 = vmatpush.msra.mxu0 %v579
  %681 = vmatpush.msra.mxu0 %v572
  %682 = vmatpush.msra.mxu0 %v565
  %683 = vmatpush.msra.mxu0 %v558
  %684 = vmatpush.msra.mxu0 %v551
  %685 = vmatpush.msra.mxu0 %v544
  %686 = vmatpush.msra.mxu0 %v537
  %687 = vmatpush.msra.mxu0 %v530
  %688 = vmatpush.msra.mxu0 %v523
  %689 = vmatpush.msra.mxu0 %v516
  %690 = vmatpush.msra.mxu0 %v509
  %691 = vmatmul.f32.gmra.mxu0 %v506
  %v692 = vpop.f32.mrf.mxu0
  %v693 = vadd.f32 %v623, %v692
  %694 = vdwg.mxu0
  %695 = vmatpush.msra.mxu0 %v615
  %696 = vmatpush.msra.mxu0 %v608
  %697 = vmatpush.msra.mxu0 %v601
  %698 = vmatpush.msra.mxu0 %v594
  %699 = vmatpush.msra.mxu0 %v587
  %700 = vmatpush.msra.mxu0 %v580
  %701 = vmatpush.msra.mxu0 %v573
  %702 = vmatpush.msra.mxu0 %v566
  %703 = vmatpush.msra.mxu0 %v559
  %704 = vmatpush.msra.mxu0 %v552
  %705 = vmatpush.msra.mxu0 %v545
  %706 = vmatpush.msra.mxu0 %v538
  %707 = vmatpush.msra.mxu0 %v531
  %708 = vmatpush.msra.mxu0 %v524
  %709 = vmatpush.msra.mxu0 %v517
  %710 = vmatpush.msra.mxu0 %v510
  %711 = vmatmul.f32.gmra.mxu0 %v506
  %v712 = vpop.f32.mrf.mxu0
  %v713 = vadd.f32 %v624, %v712
  %714 = vdwg.mxu0
  %715 = vmatpush.msra.mxu0 %v616
  %716 = vmatpush.msra.mxu0 %v609
  %717 = vmatpush.msra.mxu0 %v602
  %718 = vmatpush.msra.mxu0 %v595
  %719 = vmatpush.msra.mxu0 %v588
  %720 = vmatpush.msra.mxu0 %v581
  %721 = vmatpush.msra.mxu0 %v574
  %722 = vmatpush.msra.mxu0 %v567
  %723 = vmatpush.msra.mxu0 %v560
  %724 = vmatpush.msra.mxu0 %v553
  %725 = vmatpush.msra.mxu0 %v546
  %726 = vmatpush.msra.mxu0 %v539
  %727 = vmatpush.msra.mxu0 %v532
  %728 = vmatpush.msra.mxu0 %v525
  %729 = vmatpush.msra.mxu0 %v518
  %730 = vmatpush.msra.mxu0 %v511
  %731 = vmatmul.f32.gmra.mxu0 %v506
  %v732 = vpop.f32.mrf.mxu0
  %v733 = vadd.f32 %v625, %v732
  %734 = vdwg.mxu0
  %735 = vmatpush.msra.mxu0 %v617
  %736 = vmatpush.msra.mxu0 %v610
  %737 = vmatpush.msra.mxu0 %v603
  %738 = vmatpush.msra.mxu0 %v596
  %739 = vmatpush.msra.mxu0 %v589
  %740 = vmatpush.msra.mxu0 %v582
  %741 = vmatpush.msra.mxu0 %v575
  %742 = vmatpush.msra.mxu0 %v568
  %743 = vmatpush.msra.mxu0 %v561
  %744 = vmatpush.msra.mxu0 %v554
  %745 = vmatpush.msra.mxu0 %v547
  %746 = vmatpush.msra.mxu0 %v540
  %747 = vmatpush.msra.mxu0 %v533
  %748 = vmatpush.msra.mxu0 %v526
  %749 = vmatpush.msra.mxu0 %v519
  %750 = vmatpush.msra.mxu0 %v512
  %751 = vmatmul.f32.gmra.mxu0 %v506
  %v752 = vpop.f32.mrf.mxu0
  %v753 = vadd.f32 %v626, %v752
  %754 = vdwg.mxu0
  %755 = vmatpush.msra.mxu0 %v618
  %756 = vmatpush.msra.mxu0 %v611
  %757 = vmatpush.msra.mxu0 %v604
  %758 = vmatpush.msra.mxu0 %v597
  %759 = vmatpush.msra.mxu0 %v590
  %760 = vmatpush.msra.mxu0 %v583
  %761 = vmatpush.msra.mxu0 %v576
  %762 = vmatpush.msra.mxu0 %v569
  %763 = vmatpush.msra.mxu0 %v562
  %764 = vmatpush.msra.mxu0 %v555
  %765 = vmatpush.msra.mxu0 %v548
  %766 = vmatpush.msra.mxu0 %v541
  %767 = vmatpush.msra.mxu0 %v534
  %768 = vmatpush.msra.mxu0 %v527
  %769 = vmatpush.msra.mxu0 %v520
  %770 = vmatpush.msra.mxu0 %v513
  %771 = vmatmul.f32.gmra.mxu0 %v506
  %v772 = vpop.f32.mrf.mxu0
  %v773 = vadd.f32 %v627, %v772
  %774 = vdwg.mxu0
  %v775 = vxor.u32 %v653, 2147483648
  %v776 = vxor.u32 %v673, 2147483648
  %v777 = vxor.u32 %v693, 2147483648
  %v778 = vxor.u32 %v713, 2147483648
  %v779 = vxor.u32 %v733, 2147483648
  %v780 = vxor.u32 %v753, 2147483648
  %v781 = vxor.u32 %v773, 2147483648
  %v782 = vmul.f32 %v775, 1.442695
  %v783 = vpow.pop %v782
  %v784 = vmul.f32 %v776, 1.442695
  %v785 = vpow.pop %v784
  %v786 = vmul.f32 %v777, 1.442695
  %v787 = vpow.pop %v786
  %v788 = vmul.f32 %v778, 1.442695
  %v789 = vpow.pop %v788
  %v790 = vmul.f32 %v779, 1.442695
  %v791 = vpow.pop %v790
  %v792 = vmul.f32 %v780, 1.442695
  %v793 = vpow.pop %v792
  %v794 = vmul.f32 %v781, 1.442695
  %v795 = vpow.pop %v794
  %v796 = vadd.f32 %v783, 1.0
  %v797 = vadd.f32 %v785, 1.0
  %v798 = vadd.f32 %v787, 1.0
  %v799 = vadd.f32 %v789, 1.0
  %v800 = vadd.f32 %v791, 1.0
  %v801 = vadd.f32 %v793, 1.0
  %v802 = vadd.f32 %v795, 1.0
  %v803 = vrcp.pop %v796
  %v804 = vmul.f32 %v796, %v803
  %v805 = vsub.f32 1.0, %v804
  %v806 = vmul.f32 %v803, %v805
  %v807 = vadd.f32 %v803, %v806
  %vm808 = vweird.f32 %v796
  %vm809 = vweird.f32 %v803
  %vm810 = vmor %vm808, %vm809
  %v811 = vsel %vm810, %v803, %v807
  %v812 = vand.u32 2147483647, %v796
  %vm813 = vcmp.eq.f32.partialorder %v812, 8.507059e+37
  %v814 = vand.u32 %v796, 2147483648
  %v815 = vor.u32 1.1754944e-38, %v814
  %v816 = vsel %vm813, %v815, %v811
  %v817 = vmul.f32 1.0, %v816
  %v818 = vrcp.pop %v797
  %v819 = vmul.f32 %v797, %v818
  %v820 = vsub.f32 1.0, %v819
  %v821 = vmul.f32 %v818, %v820
  %v822 = vadd.f32 %v818, %v821
  %vm823 = vweird.f32 %v797
  %vm824 = vweird.f32 %v818
  %vm825 = vmor %vm823, %vm824
  %v826 = vsel %vm825, %v818, %v822
  %v827 = vand.u32 2147483647, %v797
  %vm828 = vcmp.eq.f32.partialorder %v827, 8.507059e+37
  %v829 = vand.u32 %v797, 2147483648
  %v830 = vor.u32 1.1754944e-38, %v829
  %v831 = vsel %vm828, %v830, %v826
  %v832 = vmul.f32 1.0, %v831
  %v833 = vrcp.pop %v798
  %v834 = vmul.f32 %v798, %v833
  %v835 = vsub.f32 1.0, %v834
  %v836 = vmul.f32 %v833, %v835
  %v837 = vadd.f32 %v833, %v836
  %vm838 = vweird.f32 %v798
  %vm839 = vweird.f32 %v833
  %vm840 = vmor %vm838, %vm839
  %v841 = vsel %vm840, %v833, %v837
  %v842 = vand.u32 2147483647, %v798
  %vm843 = vcmp.eq.f32.partialorder %v842, 8.507059e+37
  %v844 = vand.u32 %v798, 2147483648
  %v845 = vor.u32 1.1754944e-38, %v844
  %v846 = vsel %vm843, %v845, %v841
  %v847 = vmul.f32 1.0, %v846
  %v848 = vrcp.pop %v799
  %v849 = vmul.f32 %v799, %v848
  %v850 = vsub.f32 1.0, %v849
  %v851 = vmul.f32 %v848, %v850
  %v852 = vadd.f32 %v848, %v851
  %vm853 = vweird.f32 %v799
  %vm854 = vweird.f32 %v848
  %vm855 = vmor %vm853, %vm854
  %v856 = vsel %vm855, %v848, %v852
  %v857 = vand.u32 2147483647, %v799
  %vm858 = vcmp.eq.f32.partialorder %v857, 8.507059e+37
  %v859 = vand.u32 %v799, 2147483648
  %v860 = vor.u32 1.1754944e-38, %v859
  %v861 = vsel %vm858, %v860, %v856
  %v862 = vmul.f32 1.0, %v861
  %v863 = vrcp.pop %v800
  %v864 = vmul.f32 %v800, %v863
  %v865 = vsub.f32 1.0, %v864
  %v866 = vmul.f32 %v863, %v865
  %v867 = vadd.f32 %v863, %v866
  %vm868 = vweird.f32 %v800
  %vm869 = vweird.f32 %v863
  %vm870 = vmor %vm868, %vm869
  %v871 = vsel %vm870, %v863, %v867
  %v872 = vand.u32 2147483647, %v800
  %vm873 = vcmp.eq.f32.partialorder %v872, 8.507059e+37
  %v874 = vand.u32 %v800, 2147483648
  %v875 = vor.u32 1.1754944e-38, %v874
  %v876 = vsel %vm873, %v875, %v871
  %v877 = vmul.f32 1.0, %v876
  %v878 = vrcp.pop %v801
  %v879 = vmul.f32 %v801, %v878
  %v880 = vsub.f32 1.0, %v879
  %v881 = vmul.f32 %v878, %v880
  %v882 = vadd.f32 %v878, %v881
  %vm883 = vweird.f32 %v801
  %vm884 = vweird.f32 %v878
  %vm885 = vmor %vm883, %vm884
  %v886 = vsel %vm885, %v878, %v882
  %v887 = vand.u32 2147483647, %v801
  %vm888 = vcmp.eq.f32.partialorder %v887, 8.507059e+37
  %v889 = vand.u32 %v801, 2147483648
  %v890 = vor.u32 1.1754944e-38, %v889
  %v891 = vsel %vm888, %v890, %v886
  %v892 = vmul.f32 1.0, %v891
  %v893 = vrcp.pop %v802
  %v894 = vmul.f32 %v802, %v893
  %v895 = vsub.f32 1.0, %v894
  %v896 = vmul.f32 %v893, %v895
  %v897 = vadd.f32 %v893, %v896
  %vm898 = vweird.f32 %v802
  %vm899 = vweird.f32 %v893
  %vm900 = vmor %vm898, %vm899
  %v901 = vsel %vm900, %v893, %v897
  %v902 = vand.u32 2147483647, %v802
  %vm903 = vcmp.eq.f32.partialorder %v902, 8.507059e+37
  %v904 = vand.u32 %v802, 2147483648
  %v905 = vor.u32 1.1754944e-38, %v904
  %v906 = vsel %vm903, %v905, %v901
  %v907 = vmul.f32 1.0, %v906
  %908 = vst [vmem:[%s15] sm:$0xff] %v817
  %909 = vst [vmem:[%s15 + $0x8] sm:$0xff] %v832
  %910 = vst [vmem:[%s15 + $0x10] sm:$0xff] %v847
  %911 = vst [vmem:[%s15 + $0x18] sm:$0xff] %v862
  %912 = vst [vmem:[%s15 + $0x20] sm:$0xff] %v877
  %913 = vst [vmem:[%s15 + $0x28] sm:$0xff] %v892
  %914 = vst.msk [vmem:[%s15 + $0x30] sm:$0xff] %vm249, %v907
  // Predicated region
  $region54: #{cvae_forward.1} parent=0 // pred_check
    _
  $region55: #{cvae_forward.1} parent=0 // pred_check_branch
    %916 = sbr.rel (0) target = $region57
  $region56: #{cvae_forward.1} parent=0 // pred_region
    _
  $region57: #{cvae_forward.1} parent=0 // pred_fallthru
    _
  // Predicated region
  $region58: #{cvae_forward.1} parent=0 // pred_check
    _
  $region59: #{cvae_forward.1} parent=0 // pred_check_branch
    %918 = sbr.rel (0) target = $region61
  $region60: #{cvae_forward.1} parent=0 // pred_region
    _
  $region61: #{cvae_forward.1} parent=0 // pred_fallthru
    _
  // Predicated region
  $region62: #{cvae_forward.1} parent=0 // pred_check
    _
  $region63: #{cvae_forward.1} parent=0 // pred_check_branch
    %920 = sbr.rel (0) target = $region65
  $region64: #{cvae_forward.1} parent=0 // pred_region
    _
  $region65: #{cvae_forward.1} parent=0 // pred_fallthru
    _
  // Predicated region
  $region66: #{cvae_forward.1} parent=0 // pred_check
    _
  $region67: #{cvae_forward.1} parent=0 // pred_check_branch
    %922 = sbr.rel (0) target = $region69
  $region68: #{cvae_forward.1} parent=0 // pred_region
    _
  $region69: #{cvae_forward.1} parent=0 // pred_fallthru
    _
  // Predicated region
  $region70: #{cvae_forward.1} parent=0 // pred_check
    _
  $region71: #{cvae_forward.1} parent=0 // pred_check_branch
    %924 = sbr.rel (0) target = $region73
  $region72: #{cvae_forward.1} parent=0 // pred_region
    _
  $region73: #{cvae_forward.1} parent=0 // pred_fallthru
    _
  // Predicated region
  $region74: #{cvae_forward.1} parent=0 // pred_check
    _
  $region75: #{cvae_forward.1} parent=0 // pred_check_branch
    %926 = sbr.rel (0) target = $region77
  $region76: #{cvae_forward.1} parent=0 // pred_region
    _
  $region77: #{cvae_forward.1} parent=0 // pred_fallthru
    _

</llo_original>
